<compile_context>
chip_gen: v6e
topology: v6e:2x2x1
jax: 0.10.0
libtpu: 0.0.40
codegen_flags: <defaults>
</compile_context>

<pallas_src>
import functools

import jax
import jax.numpy as jnp
from jax.experimental import pallas as pl
from jax.experimental.pallas import tpu as pltpu

BN_EPS = 1e-3  # torchvision EfficientNet uses BatchNorm2d(eps=1e-3)

_VMEM_LIMIT = 48 * 1024 * 1024   # safe on v5e/v6e (128 MiB) and v7x (64 MiB)
_ROW_TILE = 512                  # multiple of 8  (MXU-friendly row tile)
_CHAN_TILE = 512                 # multiple of 128 (lane tile for depthwise)


def _row_tile(m):
    # block dim equal to the full dim is exempt from the /8 rule; otherwise 512
    return m if m <= _ROW_TILE else _ROW_TILE


def _chan_tile(c):
    return c if c <= _CHAN_TILE else _CHAN_TILE


def _silu(y):  # f32 in / f32 out (EUP exp)
    return y * (1.0 / (1.0 + jnp.exp(-y)))


def _sigmoid(y):
    return 1.0 / (1.0 + jnp.exp(-y))


# -----------------------------------------------------------------------------
# Pallas kernels
# -----------------------------------------------------------------------------
def _mm_kernel(*refs, act, has_scale, has_res):
    # Fused: conv-as-matmul (bf16 MXU) + BN scale/shift + activation + residual.
    i = 0
    x_ref = refs[i]; i += 1
    w_ref = refs[i]; i += 1
    scale_ref = None
    if has_scale:
        scale_ref = refs[i]; i += 1
    shift_ref = refs[i]; i += 1
    res_ref = None
    if has_res:
        res_ref = refs[i]; i += 1
    o_ref = refs[i]

    acc = jnp.dot(x_ref[...], w_ref[...], preferred_element_type=jnp.float32)
    if has_scale:
        y = acc * scale_ref[...] + shift_ref[...]
    else:
        y = acc + shift_ref[...]
    if act == "silu":
        y = _silu(y)
    if has_res:
        y = y + res_ref[...].astype(jnp.float32)
    o_ref[...] = y.astype(o_ref.dtype)


def _mm2_kernel(x_ref, w1_ref, s1_ref, b1_ref, w2_ref, s2_ref, b2_ref,
                *rest, has_res):
    # Fused-MBConv body: expand conv (as matmul) + BN + SiLU, immediately
    # chained into the 1x1 projection matmul + BN + optional residual.
    if has_res:
        res_ref, o_ref = rest
    else:
        (o_ref,) = rest
    h = jnp.dot(x_ref[...], w1_ref[...], preferred_element_type=jnp.float32)
    h = _silu(h * s1_ref[...] + b1_ref[...]).astype(jnp.bfloat16)
    y = jnp.dot(h, w2_ref[...], preferred_element_type=jnp.float32)
    y = y * s2_ref[...] + b2_ref[...]
    if has_res:
        y = y + res_ref[...].astype(jnp.float32)
    o_ref[...] = y.astype(o_ref.dtype)


def _se_tail_kernel(x_ref, w1_ref, b1_ref, w2_ref, b2_ref,
                    wp_ref, sp_ref, bp_ref, *rest, inv_s, has_res):
    # Entire MBConv tail per sample: SE squeeze (avg-pool) + FC1/SiLU +
    # FC2/sigmoid gate + gated 1x1 projection + BN + optional residual.
    if has_res:
        res_ref, o_ref = rest
    else:
        (o_ref,) = rest
    x = x_ref[0].astype(jnp.float32)                               # (S, Ce)
    pooled = jnp.sum(x, axis=0, keepdims=True) * inv_s             # (1, Ce)
    s = jnp.dot(pooled.astype(jnp.bfloat16), w1_ref[...],
                preferred_element_type=jnp.float32) + b1_ref[...]  # (1, Csq)
    s = _silu(s).astype(jnp.bfloat16)
    g = jnp.dot(s, w2_ref[...],
                preferred_element_type=jnp.float32) + b2_ref[...]  # (1, Ce)
    gate = _sigmoid(g)
    xg = (x * gate).astype(jnp.bfloat16)                           # (S, Ce)
    y = jnp.dot(xg, wp_ref[...], preferred_element_type=jnp.float32)
    y = y * sp_ref[...] + bp_ref[...]
    if has_res:
        y = y + res_ref[0].astype(jnp.float32)
    o_ref[0] = y.astype(o_ref.dtype)


def _dw_s1_kernel(x_ref, w_ref, scale_ref, shift_ref, o_ref, *, H, W):
    # Stride-1 depthwise 3x3: taps built in-kernel from the padded activation.
    x = x_ref[0].astype(jnp.float32)                               # (H+2, W+2, tc)
    acc = None
    for di in range(3):
        for dj in range(3):
            tap = x[di:di + H, dj:dj + W, :] * w_ref[di * 3 + dj]
            acc = tap if acc is None else acc + tap
    y = acc * scale_ref[...] + shift_ref[...]
    o_ref[0] = _silu(y).astype(o_ref.dtype)


def _dw_tap_kernel(x_ref, w_ref, scale_ref, shift_ref, o_ref):
    # Stride-2 depthwise 3x3 via pre-extracted taps (only 2 layers in the net).
    acc = None
    for t in range(9):
        tap = x_ref[t].astype(jnp.float32) * w_ref[t]
        acc = tap if acc is None else acc + tap
    y = acc * scale_ref[...] + shift_ref[...]
    o_ref[...] = _silu(y).astype(o_ref.dtype)


def _head_pool_kernel(x_ref, w_ref, scale_ref, shift_ref, o_ref, *, inv_s):
    # Head 1x1 conv + BN + SiLU fused with the global average pool.
    y = jnp.dot(x_ref[0], w_ref[...], preferred_element_type=jnp.float32)
    y = _silu(y * scale_ref[...] + shift_ref[...])                 # (S, Cout)
    o_ref[0] = jnp.sum(y, axis=0, keepdims=True) * inv_s           # (1, Cout)


# -----------------------------------------------------------------------------
# Cached pallas_call factories
# -----------------------------------------------------------------------------
@functools.lru_cache(maxsize=None)
def _mm_call(M, K, N, tm, act, has_scale, has_res, out_dtype):
    in_specs = [
        pl.BlockSpec((tm, K), lambda i: (i, 0)),
        pl.BlockSpec((K, N), lambda i: (0, 0)),
    ]
    if has_scale:
        in_specs.append(pl.BlockSpec((1, N), lambda i: (0, 0)))
    in_specs.append(pl.BlockSpec((1, N), lambda i: (0, 0)))
    if has_res:
        in_specs.append(pl.BlockSpec((tm, N), lambda i: (i, 0)))
    return pl.pallas_call(
        functools.partial(_mm_kernel, act=act, has_scale=has_scale, has_res=has_res),
        out_shape=jax.ShapeDtypeStruct((M, N), out_dtype),
        grid=(pl.cdiv(M, tm),),
        in_specs=in_specs,
        out_specs=pl.BlockSpec((tm, N), lambda i: (i, 0)),
        compiler_params=pltpu.CompilerParams(
            dimension_semantics=("parallel",), vmem_limit_bytes=_VMEM_LIMIT),
    )


@functools.lru_cache(maxsize=None)
def _mm2_call(M, K, Ce, Co, tm, has_res):
    in_specs = [
        pl.BlockSpec((tm, K), lambda i: (i, 0)),
        pl.BlockSpec((K, Ce), lambda i: (0, 0)),
        pl.BlockSpec((1, Ce), lambda i: (0, 0)),
        pl.BlockSpec((1, Ce), lambda i: (0, 0)),
        pl.BlockSpec((Ce, Co), lambda i: (0, 0)),
        pl.BlockSpec((1, Co), lambda i: (0, 0)),
        pl.BlockSpec((1, Co), lambda i: (0, 0)),
    ]
    if has_res:
        in_specs.append(pl.BlockSpec((tm, Co), lambda i: (i, 0)))
    return pl.pallas_call(
        functools.partial(_mm2_kernel, has_res=has_res),
        out_shape=jax.ShapeDtypeStruct((M, Co), jnp.bfloat16),
        grid=(pl.cdiv(M, tm),),
        in_specs=in_specs,
        out_specs=pl.BlockSpec((tm, Co), lambda i: (i, 0)),
        compiler_params=pltpu.CompilerParams(
            dimension_semantics=("parallel",), vmem_limit_bytes=_VMEM_LIMIT),
    )


@functools.lru_cache(maxsize=None)
def _se_tail_call(N, S, Ce, Csq, Co, has_res):
    in_specs = [
        pl.BlockSpec((1, S, Ce), lambda n: (n, 0, 0)),
        pl.BlockSpec((Ce, Csq), lambda n: (0, 0)),
        pl.BlockSpec((1, Csq), lambda n: (0, 0)),
        pl.BlockSpec((Csq, Ce), lambda n: (0, 0)),
        pl.BlockSpec((1, Ce), lambda n: (0, 0)),
        pl.BlockSpec((Ce, Co), lambda n: (0, 0)),
        pl.BlockSpec((1, Co), lambda n: (0, 0)),
        pl.BlockSpec((1, Co), lambda n: (0, 0)),
    ]
    if has_res:
        in_specs.append(pl.BlockSpec((1, S, Co), lambda n: (n, 0, 0)))
    return pl.pallas_call(
        functools.partial(_se_tail_kernel, inv_s=1.0 / float(S), has_res=has_res),
        out_shape=jax.ShapeDtypeStruct((N, S, Co), jnp.bfloat16),
        grid=(N,),
        in_specs=in_specs,
        out_specs=pl.BlockSpec((1, S, Co), lambda n: (n, 0, 0)),
        compiler_params=pltpu.CompilerParams(
            dimension_semantics=("parallel",), vmem_limit_bytes=_VMEM_LIMIT),
    )


@functools.lru_cache(maxsize=None)
def _dw_s1_call(N, H, W, C, tc):
    return pl.pallas_call(
        functools.partial(_dw_s1_kernel, H=H, W=W),
        out_shape=jax.ShapeDtypeStruct((N, H, W, C), jnp.bfloat16),
        grid=(N, pl.cdiv(C, tc)),
        in_specs=[
            pl.BlockSpec((1, H + 2, W + 2, tc), lambda n, c: (n, 0, 0, c)),
            pl.BlockSpec((9, 1, tc), lambda n, c: (0, 0, c)),
            pl.BlockSpec((1, tc), lambda n, c: (0, c)),
            pl.BlockSpec((1, tc), lambda n, c: (0, c)),
        ],
        out_specs=pl.BlockSpec((1, H, W, tc), lambda n, c: (n, 0, 0, c)),
        compiler_params=pltpu.CompilerParams(
            dimension_semantics=("parallel", "parallel"),
            vmem_limit_bytes=_VMEM_LIMIT),
    )


@functools.lru_cache(maxsize=None)
def _dw_tap_call(M, C, tm):
    return pl.pallas_call(
        _dw_tap_kernel,
        out_shape=jax.ShapeDtypeStruct((M, C), jnp.bfloat16),
        grid=(pl.cdiv(M, tm),),
        in_specs=[
            pl.BlockSpec((9, tm, C), lambda i: (0, i, 0)),
            pl.BlockSpec((9, 1, C), lambda i: (0, 0, 0)),
            pl.BlockSpec((1, C), lambda i: (0, 0)),
            pl.BlockSpec((1, C), lambda i: (0, 0)),
        ],
        out_specs=pl.BlockSpec((tm, C), lambda i: (i, 0)),
        compiler_params=pltpu.CompilerParams(
            dimension_semantics=("parallel",), vmem_limit_bytes=_VMEM_LIMIT),
    )


@functools.lru_cache(maxsize=None)
def _head_pool_call(N, S, Cin, Cout):
    return pl.pallas_call(
        functools.partial(_head_pool_kernel, inv_s=1.0 / float(S)),
        out_shape=jax.ShapeDtypeStruct((N, 1, Cout), jnp.float32),
        grid=(N,),
        in_specs=[
            pl.BlockSpec((1, S, Cin), lambda n: (n, 0, 0)),
            pl.BlockSpec((Cin, Cout), lambda n: (0, 0)),
            pl.BlockSpec((1, Cout), lambda n: (0, 0)),
            pl.BlockSpec((1, Cout), lambda n: (0, 0)),
        ],
        out_specs=pl.BlockSpec((1, 1, Cout), lambda n: (n, 0, 0)),
        compiler_params=pltpu.CompilerParams(
            dimension_semantics=("parallel",), vmem_limit_bytes=_VMEM_LIMIT),
    )


# -----------------------------------------------------------------------------
# Thin wrappers (no activation padding; full-dim K/N blocks, tiled M rows)
# -----------------------------------------------------------------------------
def matmul_pallas(x, w, shift, scale=None, act="none", residual=None,
                  out_dtype=jnp.bfloat16):
    M, K = x.shape
    N = w.shape[1]
    tm = _row_tile(M)
    args = [x.astype(jnp.bfloat16), w.astype(jnp.bfloat16)]
    if scale is not None:
        args.append(scale.reshape(1, N).astype(jnp.float32))
    args.append(shift.reshape(1, N).astype(jnp.float32))
    if residual is not None:
        args.append(residual.astype(jnp.bfloat16))
    fn = _mm_call(M, K, N, tm, act, scale is not None, residual is not None,
                  out_dtype)
    return fn(*args)


def depthwise_s1_pallas(x, w9, scale, shift):
    n, h, w, c = x.shape
    xp = jnp.pad(x.astype(jnp.bfloat16), ((0, 0), (1, 1), (1, 1), (0, 0)))
    tc = _chan_tile(c)
    return _dw_s1_call(n, h, w, c, tc)(
        xp, w9.astype(jnp.float32),
        scale.reshape(1, c).astype(jnp.float32),
        shift.reshape(1, c).astype(jnp.float32))


def dw_tap_pallas(taps, w9, scale, shift):
    _, m, c = taps.shape
    tm = _row_tile(m)
    return _dw_tap_call(m, c, tm)(
        taps.astype(jnp.bfloat16), w9.astype(jnp.float32),
        scale.reshape(1, c).astype(jnp.float32),
        shift.reshape(1, c).astype(jnp.float32))


# -----------------------------------------------------------------------------
# Glue: im2col / tap extraction (plain JAX reshapes & slices)
# -----------------------------------------------------------------------------
def _out_size(h, k, stride):
    pad = (k - 1) // 2
    return (h + 2 * pad - k) // stride + 1


def im2col(x, k, stride):
    # Materialized k*k patch matrix (bf16, exact K; no 128 padding).
    n, h, w, c = x.shape
    pad = (k - 1) // 2
    xp = jnp.pad(x, ((0, 0), (pad, pad), (pad, pad), (0, 0)))
    ho, wo = _out_size(h, k, stride), _out_size(w, k, stride)
    cols = []
    for di in range(k):
        for dj in range(k):
            cols.append(xp[:, di:di + stride * ho:stride, dj:dj + stride * wo:stride, :])
    patches = jnp.stack(cols, axis=3)                   # (N, Ho, Wo, k*k, C)
    return patches.reshape(n * ho * wo, k * k * c), ho, wo


def dw_taps(x, k, stride):
    # Only for the two stride-2 depthwise layers; stride-1 depthwise builds
    # its taps in-kernel from the padded activation (no HBM tap stack).
    n, h, w, c = x.shape
    pad = (k - 1) // 2
    xp = jnp.pad(x, ((0, 0), (pad, pad), (pad, pad), (0, 0)))
    ho, wo = _out_size(h, k, stride), _out_size(w, k, stride)
    taps = []
    for di in range(k):
        for dj in range(k):
            taps.append(
                xp[:, di:di + stride * ho:stride, dj:dj + stride * wo:stride, :]
                .reshape(n * ho * wo, c))
    return jnp.stack(taps, axis=0), ho, wo              # (k*k, M, C)


# -----------------------------------------------------------------------------
# Layer helpers built from the kernels
# -----------------------------------------------------------------------------
def conv_bn_act(x, p, k, stride, act, residual=None):
    n, h, w, cin = x.shape
    cout = p["shift"].shape[-1]
    if k == 1:
        cols, ho, wo = x.reshape(n * h * w, cin), h, w
    else:
        cols, ho, wo = im2col(x, k, stride)
    res2d = None if residual is None else residual.reshape(n * ho * wo, cout)
    y = matmul_pallas(cols, p["w"], p["shift"], scale=p["scale"], act=act,
                      residual=res2d)
    return y.reshape(n, ho, wo, cout)


def fused_expand_project(x, blk, k, stride, residual=None):
    # Fused-MBConv: expand 3x3 conv + BN + SiLU chained into the 1x1 projection
    # conv + BN (+ residual) in a single kernel; the expanded activation never
    # touches HBM.
    n, h, w, cin = x.shape
    pe, pp = blk["expand"], blk["project"]
    ce = pe["shift"].shape[-1]
    co = pp["shift"].shape[-1]
    cols, ho, wo = im2col(x, k, stride)
    m, kk = cols.shape
    tm = _row_tile(m)
    args = [cols.astype(jnp.bfloat16), pe["w"].astype(jnp.bfloat16),
            pe["scale"].reshape(1, ce).astype(jnp.float32),
            pe["shift"].reshape(1, ce).astype(jnp.float32),
            pp["w"].astype(jnp.bfloat16),
            pp["scale"].reshape(1, co).astype(jnp.float32),
            pp["shift"].reshape(1, co).astype(jnp.float32)]
    if residual is not None:
        args.append(residual.reshape(m, co).astype(jnp.bfloat16))
    y = _mm2_call(m, kk, ce, co, tm, residual is not None)(*args)
    return y.reshape(n, ho, wo, co)


def depthwise_bn_act(x, p, k, stride):
    n, h, w, c = x.shape
    if stride == 1:
        return depthwise_s1_pallas(x, p["w"], p["scale"], p["shift"])
    taps, ho, wo = dw_taps(x, k, stride)
    y = dw_tap_pallas(taps, p["w"], p["scale"], p["shift"])
    return y.reshape(n, ho, wo, c)


def se_and_project(x_dw, x_in, blk, use_res):
    # Whole MBConv tail (SE squeeze/excite, gate, 1x1 projection, BN, residual)
    # in a single per-sample kernel: the expanded activation is read once.
    n, h, w, ce = x_dw.shape
    cout = blk["project"]["shift"].shape[-1]
    csq = blk["se"]["b1"].shape[-1]
    xs = x_dw.reshape(n, h * w, ce).astype(jnp.bfloat16)
    args = [xs,
            blk["se"]["w1"].astype(jnp.bfloat16),
            blk["se"]["b1"].reshape(1, csq).astype(jnp.float32),
            blk["se"]["w2"].astype(jnp.bfloat16),
            blk["se"]["b2"].reshape(1, ce).astype(jnp.float32),
            blk["project"]["w"].astype(jnp.bfloat16),
            blk["project"]["scale"].reshape(1, cout).astype(jnp.float32),
            blk["project"]["shift"].reshape(1, cout).astype(jnp.float32)]
    if use_res:
        args.append(x_in.reshape(n, h * w, cout).astype(jnp.bfloat16))
    y = _se_tail_call(n, h * w, ce, csq, cout, use_res)(*args)
    return y.reshape(n, h, w, cout)


def apply_block(x, blk, btype, expand, k, stride, use_res):
    # TODO(synk): stochastic depth is identity at inference; not emitted.
    res = x if use_res else None
    if btype == "fused":
        if expand == 1:
            return conv_bn_act(x, blk["conv"], k, stride, "silu", residual=res)
        return fused_expand_project(x, blk, k, stride, residual=res)
    # MBConv
    h = conv_bn_act(x, blk["expand"], 1, 1, "silu")
    h = depthwise_bn_act(h, blk["dw"], k, stride)
    return se_and_project(h, x, blk, use_res)


# -----------------------------------------------------------------------------
# Parameter construction (deterministic, synthetic)
# -----------------------------------------------------------------------------
class KeyGen:
    def __init__(self, seed=0):
        self._key = jax.random.PRNGKey(seed)

    def __call__(self):
        self._key, sub = jax.random.split(self._key)
        return sub


def _bn_scale_shift(kg, c):
    gamma = 1.0 + 0.1 * jax.random.normal(kg(), (c,), jnp.float32)
    beta = 0.05 * jax.random.normal(kg(), (c,), jnp.float32)
    mean = 0.05 * jax.random.normal(kg(), (c,), jnp.float32)
    var = 1.0 + 0.2 * jax.random.uniform(kg(), (c,), jnp.float32)
    scale = gamma / jnp.sqrt(var + BN_EPS)
    return scale, beta - mean * scale


def make_conv_bn(kg, k, cin, cout):
    w = jax.random.normal(kg(), (k, k, cin, cout), jnp.float32) * (2.0 / (k * k * cin)) ** 0.5
    scale, shift = _bn_scale_shift(kg, cout)
    return {"w": w.reshape(k * k * cin, cout).astype(jnp.bfloat16),
            "scale": scale, "shift": shift}


def make_dw_bn(kg, k, c):
    w = jax.random.normal(kg(), (k, k, c), jnp.float32) * (2.0 / (k * k)) ** 0.5
    scale, shift = _bn_scale_shift(kg, c)
    return {"w": w.reshape(k * k, 1, c), "scale": scale, "shift": shift}


def make_se(kg, c, csq):
    return {
        "w1": (jax.random.normal(kg(), (c, csq), jnp.float32) * (1.0 / c) ** 0.5
               ).astype(jnp.bfloat16),
        "b1": 0.05 * jax.random.normal(kg(), (csq,), jnp.float32),
        "w2": (jax.random.normal(kg(), (csq, c), jnp.float32) * (1.0 / csq) ** 0.5
               ).astype(jnp.bfloat16),
        "b2": 0.05 * jax.random.normal(kg(), (c,), jnp.float32),
    }


# torchvision efficientnet_v2_s backbone configuration:
# (block_type, expand_ratio, kernel, stride, in_ch, out_ch, num_layers)
STAGE_CFG = [
    ("fused", 1, 3, 1, 24, 24, 2),
    ("fused", 4, 3, 2, 24, 48, 4),
    ("fused", 4, 3, 2, 48, 64, 4),
    ("mbconv", 4, 3, 2, 64, 128, 6),
    ("mbconv", 6, 3, 1, 128, 160, 9),
    ("mbconv", 6, 3, 2, 160, 256, 15),
]


def build_params(num_classes, seed=0):
    # TODO(synk): IMAGENET1K_V1 pretrained weights cannot be loaded here;
    # parameters are deterministic synthetic values of the correct shapes.
    kg = KeyGen(seed)
    params = {"stem": make_conv_bn(kg, 3, 3, 24)}
    stages = []
    for btype, expand, k, stride, cin0, cout, n in STAGE_CFG:
        blocks = []
        for bi in range(n):
            cin = cin0 if bi == 0 else cout
            blk = {}
            if btype == "fused":
                if expand == 1:
                    blk["conv"] = make_conv_bn(kg, k, cin, cout)
                else:
                    ce = cin * expand
                    blk["expand"] = make_conv_bn(kg, k, cin, ce)
                    blk["project"] = make_conv_bn(kg, 1, ce, cout)
            else:
                ce = cin * expand
                blk["expand"] = make_conv_bn(kg, 1, cin, ce)
                blk["dw"] = make_dw_bn(kg, k, ce)
                blk["se"] = make_se(kg, ce, max(1, cin // 4))
                blk["project"] = make_conv_bn(kg, 1, ce, cout)
            blocks.append(blk)
        stages.append(blocks)
    params["stages"] = stages
    params["head"] = make_conv_bn(kg, 1, 256, 1280)   # classifier in_features = 1280
    params["fc_w"] = (jax.random.normal(kg(), (1280, num_classes), jnp.float32)
                      * (1.0 / 1280) ** 0.5).astype(jnp.bfloat16)
    params["fc_b"] = 0.05 * jax.random.normal(kg(), (num_classes,), jnp.float32)
    return params


# -----------------------------------------------------------------------------
# Full forward pass (inference semantics)
# -----------------------------------------------------------------------------
def light_efficientnet_v2_forward(x_nchw, params):
    x = jnp.transpose(x_nchw, (0, 2, 3, 1)).astype(jnp.bfloat16)   # NCHW -> NHWC
    x = conv_bn_act(x, params["stem"], 3, 2, "silu")
    for si, (btype, expand, k, stride, cin0, cout, nblk) in enumerate(STAGE_CFG):
        for bi in range(nblk):
            cin = cin0 if bi == 0 else cout
            s = stride if bi == 0 else 1
            use_res = (s == 1 and cin == cout)
            x = apply_block(x, params["stages"][si][bi], btype, expand, k, s, use_res)
    # Head 1x1 conv + SiLU + global average pool fused in one per-sample kernel.
    n, h, w, c = x.shape
    ph = params["head"]
    cout = ph["shift"].shape[-1]
    pooled = _head_pool_call(n, h * w, c, cout)(
        x.reshape(n, h * w, c).astype(jnp.bfloat16),
        ph["w"].astype(jnp.bfloat16),
        ph["scale"].reshape(1, cout).astype(jnp.float32),
        ph["shift"].reshape(1, cout).astype(jnp.float32)).reshape(n, cout)
    # TODO(synk): nn.Dropout(p=0.3) is identity at inference; no kernel emitted.
    logits = matmul_pallas(pooled, params["fc_w"], params["fc_b"],
                           act="none", out_dtype=jnp.float32)
    return logits


if __name__ == "__main__":
    class_names = ["cat", "dog", "bird", "car", "plane"]
    params = build_params(len(class_names), seed=0)
    x = jax.random.normal(jax.random.PRNGKey(0), (2, 3, 32, 32), jnp.float32)
    logits = light_efficientnet_v2_forward(x, params)
    logits = jax.block_until_ready(logits)
    assert logits.shape == (2, len(class_names)), logits.shape
    assert bool(jnp.all(jnp.isfinite(logits)))
    print("KERNEL_OK")
</pallas_src>

<mosaic_0001>
module attributes {stable_mosaic.version = 11 : i64} {
  func.func @_mm_kernel(%arg0: i32, %arg1: memref<512x27xbf16, #tpu.memory_space<vmem>>, %arg2: memref<27x24xbf16, #tpu.memory_space<vmem>>, %arg3: memref<1x24xf32, #tpu.memory_space<vmem>>, %arg4: memref<1x24xf32, #tpu.memory_space<vmem>>, %arg5: memref<512x24xbf16, #tpu.memory_space<vmem>>) attributes {dimension_semantics = [#tpu.dimension_semantics<parallel>], iteration_bounds = array<i64: 1>, scalar_prefetch = 0 : i64, scratch_operands = 0 : i64, tpu.core_type = #tpu.core_type<tc>, window_params = [{transform_indices = @transform_0, window_bounds = array<i64: 512, 27>}, {pipeline_mode = #tpu.pipeline_mode<synchronous>, transform_indices = @transform_1, window_bounds = array<i64: 27, 24>}, {pipeline_mode = #tpu.pipeline_mode<synchronous>, transform_indices = @transform_2, window_bounds = array<i64: 1, 24>}, {pipeline_mode = #tpu.pipeline_mode<synchronous>, transform_indices = @transform_3, window_bounds = array<i64: 1, 24>}, {transform_indices = @transform_4, window_bounds = array<i64: 512, 24>}]} {
    %c0 = arith.constant 0 : index
    %c0_0 = arith.constant 0 : index
    %0 = vector.load %arg1[%c0, %c0_0] : memref<512x27xbf16, #tpu.memory_space<vmem>>, vector<512x27xbf16>
    %c0_1 = arith.constant 0 : index
    %c0_2 = arith.constant 0 : index
    %1 = vector.load %arg2[%c0_1, %c0_2] : memref<27x24xbf16, #tpu.memory_space<vmem>>, vector<27x24xbf16>
    %cst = arith.constant dense<0.000000e+00> : vector<512x24xf32>
    %2 = tpu.matmul %0, %1, %cst {dimension_numbers = #tpu.dot_dimension_numbers<[1], [0], [0], [1], [0, 0, 1, 1], [], []>} : vector<512x27xbf16>, vector<27x24xbf16>, vector<512x24xf32> -> vector<512x24xf32>
    %c0_3 = arith.constant 0 : index
    %c0_4 = arith.constant 0 : index
    %3 = vector.load %arg3[%c0_3, %c0_4] : memref<1x24xf32, #tpu.memory_space<vmem>>, vector<1x24xf32>
    %4 = vector.broadcast %3 : vector<1x24xf32> to vector<512x24xf32>
    %5 = arith.mulf %2, %4 : vector<512x24xf32>
    %c0_5 = arith.constant 0 : index
    %c0_6 = arith.constant 0 : index
    %6 = vector.load %arg4[%c0_5, %c0_6] : memref<1x24xf32, #tpu.memory_space<vmem>>, vector<1x24xf32>
    %7 = vector.broadcast %6 : vector<1x24xf32> to vector<512x24xf32>
    %8 = arith.addf %5, %7 : vector<512x24xf32>
    %cst_7 = arith.constant 0.000000e+00 : f32
    %9 = vector.broadcast %cst_7 : f32 to vector<512x24xf32>
    %10 = arith.subf %9, %8 : vector<512x24xf32>
    %11 = math.exp %10 : vector<512x24xf32>
    %cst_8 = arith.constant 1.000000e+00 : f32
    %12 = vector.broadcast %cst_8 : f32 to vector<512x24xf32>
    %13 = arith.addf %12, %11 : vector<512x24xf32>
    %cst_9 = arith.constant 1.000000e+00 : f32
    %14 = vector.broadcast %cst_9 : f32 to vector<512x24xf32>
    %15 = arith.divf %14, %13 : vector<512x24xf32>
    %16 = arith.mulf %8, %15 : vector<512x24xf32>
    %17 = arith.truncf %16 : vector<512x24xf32> to vector<512x24xbf16>
    %c0_10 = arith.constant 0 : index
    %c0_11 = arith.constant 0 : index
    %18 = vector.load %arg5[%c0_10, %c0_11] : memref<512x24xbf16, #tpu.memory_space<vmem>>, vector<512x24xbf16>
    tpu.vector_store %arg5[%c0_10, %c0_11], %17 {strides = array<i32>} : memref<512x24xbf16, #tpu.memory_space<vmem>>, vector<512x24xbf16>,
    return
  }
  func.func @transform_0(%arg0: i32) -> (i32, i32) {
    %c0_i32 = arith.constant 0 : i32
    %c0_i32_0 = arith.constant 0 : i32
    return %arg0, %c0_i32 : i32, i32
  }
  func.func @transform_1(%arg0: i32) -> (i32, i32) {
    %c0_i32 = arith.constant 0 : i32
    %c0_i32_0 = arith.constant 0 : i32
    %c0_i32_1 = arith.constant 0 : i32
    return %c0_i32, %c0_i32_0 : i32, i32
  }
  func.func @transform_2(%arg0: i32) -> (i32, i32) {
    %c0_i32 = arith.constant 0 : i32
    %c0_i32_0 = arith.constant 0 : i32
    %c0_i32_1 = arith.constant 0 : i32
    return %c0_i32, %c0_i32_0 : i32, i32
  }
  func.func @transform_3(%arg0: i32) -> (i32, i32) {
    %c0_i32 = arith.constant 0 : i32
    %c0_i32_0 = arith.constant 0 : i32
    %c0_i32_1 = arith.constant 0 : i32
    return %c0_i32, %c0_i32_0 : i32, i32
  }
  func.func @transform_4(%arg0: i32) -> (i32, i32) {
    %c0_i32 = arith.constant 0 : i32
    %c0_i32_0 = arith.constant 0 : i32
    return %arg0, %c0_i32 : i32, i32
  }
}

</mosaic_0001>

<llo_original>
// kernel: tpu_custom_call.1
$region0: #{tpu_custom_call.1}
  #allocation0 [shape = 'u32[]', space=smem, size = 0x4, offset = 0x4, fixed_abs, tag = 'smem constant byte address 0x4 - core index']
  #allocation1 [shape = 'u32[144,128]{1,0:T(1,128)}', space=vmem, size = 0x12000, scoped, tag = 'internal scratch']
  %s0 = inlined_call_operand.vmem [shape: bf16[512,27], index: 0, kind: input, shape index: {}]
  %s1 = inlined_call_operand.vmem [shape: bf16[27,24], index: 1, kind: input, shape index: {}]
  %s2 = inlined_call_operand.vmem [shape: f32[1,24], index: 2, kind: input, shape index: {}]
  %s3 = inlined_call_operand.vmem [shape: f32[1,24], index: 3, kind: input, shape index: {}]
  %s4 = inlined_call_operand.vmem [shape: bf16[512,24], index: 4, kind: output, shape index: {}]
  %s5 = sld [smem:[#allocation0]]
  $region26: #{tpu_custom_call.1} parent=0
    _
  %s7 = ssub.s32 1, %s5
  %s8 = scalar_select 0, %s7, %s5
  // Predicated region
  $region2: #{tpu_custom_call.1} parent=0 // pred_check
    _
  $region3: #{tpu_custom_call.1} parent=0 // pred_check_branch
    %10 = sbr.rel (0) target = $region5
  $region4: #{tpu_custom_call.1} parent=0 // pred_region
    _
  $region5: #{tpu_custom_call.1} parent=0 // pred_fallthru
    _
  // Predicated region
  $region6: #{tpu_custom_call.1} parent=0 // pred_check
    _
  $region7: #{tpu_custom_call.1} parent=0 // pred_check_branch
    %12 = sbr.rel (0) target = $region9
  $region8: #{tpu_custom_call.1} parent=0 // pred_region
    _
  $region9: #{tpu_custom_call.1} parent=0 // pred_fallthru
    _
  // Predicated region
  $region10: #{tpu_custom_call.1} parent=0 // pred_check
    _
  $region11: #{tpu_custom_call.1} parent=0 // pred_check_branch
    %14 = sbr.rel (0) target = $region13
  $region12: #{tpu_custom_call.1} parent=0 // pred_region
    _
  $region13: #{tpu_custom_call.1} parent=0 // pred_fallthru
    _
  // Predicated region
  $region14: #{tpu_custom_call.1} parent=0 // pred_check
    _
  $region15: #{tpu_custom_call.1} parent=0 // pred_check_branch
    %16 = sbr.rel (0) target = $region17
  $region16: #{tpu_custom_call.1} parent=0 // pred_region
    _
  $region17: #{tpu_custom_call.1} parent=0 // pred_fallthru
    _
  %v18 = vld [vmem:[%s0] sm:$0xf]
  %v19 = vld [vmem:[%s0 + $0x4] sm:$0xf]
  %v20 = vld [vmem:[%s0 + $0x8] sm:$0xf]
  %v21 = vld [vmem:[%s0 + $0xc] sm:$0xf]
  %v22 = vld [vmem:[%s0 + $0x10] sm:$0xf]
  %v23 = vld [vmem:[%s0 + $0x14] sm:$0xf]
  %v24 = vld [vmem:[%s0 + $0x18] sm:$0xf]
  %v25 = vld [vmem:[%s0 + $0x1c] sm:$0xf]
  %v26 = vld [vmem:[%s0 + $0x20] sm:$0xf]
  %v27 = vld [vmem:[%s0 + $0x24] sm:$0xf]
  %v28 = vld [vmem:[%s0 + $0x28] sm:$0xf]
  %v29 = vld [vmem:[%s0 + $0x2c] sm:$0xf]
  %v30 = vld [vmem:[%s0 + $0x30] sm:$0xf]
  %v31 = vld [vmem:[%s0 + $0x34] sm:$0xf]
  %v32 = vld [vmem:[%s0 + $0x38] sm:$0xf]
  %v33 = vld [vmem:[%s0 + $0x3c] sm:$0xf]
  %v34 = vld [vmem:[%s0 + $0x40] sm:$0xf]
  %v35 = vld [vmem:[%s0 + $0x44] sm:$0xf]
  %v36 = vld [vmem:[%s0 + $0x48] sm:$0xf]
  %v37 = vld [vmem:[%s0 + $0x4c] sm:$0xf]
  %v38 = vld [vmem:[%s0 + $0x50] sm:$0xf]
  %v39 = vld [vmem:[%s0 + $0x54] sm:$0xf]
  %v40 = vld [vmem:[%s0 + $0x58] sm:$0xf]
  %v41 = vld [vmem:[%s0 + $0x5c] sm:$0xf]
  %v42 = vld [vmem:[%s0 + $0x60] sm:$0xf]
  %v43 = vld [vmem:[%s0 + $0x64] sm:$0xf]
  %v44 = vld [vmem:[%s0 + $0x68] sm:$0xf]
  %v45 = vld [vmem:[%s0 + $0x6c] sm:$0xf]
  %v46 = vld [vmem:[%s0 + $0x70] sm:$0xf]
  %v47 = vld [vmem:[%s0 + $0x74] sm:$0xf]
  %v48 = vld [vmem:[%s0 + $0x78] sm:$0xf]
  %v49 = vld [vmem:[%s0 + $0x7c] sm:$0xf]
  %v50 = vld [vmem:[%s0 + $0x80] sm:$0xf]
  %v51 = vld [vmem:[%s0 + $0x84] sm:$0xf]
  %v52 = vld [vmem:[%s0 + $0x88] sm:$0xf]
  %v53 = vld [vmem:[%s0 + $0x8c] sm:$0xf]
  %v54 = vld [vmem:[%s0 + $0x90] sm:$0xf]
  %v55 = vld [vmem:[%s0 + $0x94] sm:$0xf]
  %v56 = vld [vmem:[%s0 + $0x98] sm:$0xf]
  %v57 = vld [vmem:[%s0 + $0x9c] sm:$0xf]
  %v58 = vld [vmem:[%s0 + $0xa0] sm:$0xf]
  %v59 = vld [vmem:[%s0 + $0xa4] sm:$0xf]
  %v60 = vld [vmem:[%s0 + $0xa8] sm:$0xf]
  %v61 = vld [vmem:[%s0 + $0xac] sm:$0xf]
  %v62 = vld [vmem:[%s0 + $0xb0] sm:$0xf]
  %v63 = vld [vmem:[%s0 + $0xb4] sm:$0xf]
  %v64 = vld [vmem:[%s0 + $0xb8] sm:$0xf]
  %v65 = vld [vmem:[%s0 + $0xbc] sm:$0xf]
  %v66 = vld [vmem:[%s0 + $0xc0] sm:$0xf]
  %v67 = vld [vmem:[%s0 + $0xc4] sm:$0xf]
  %v68 = vld [vmem:[%s0 + $0xc8] sm:$0xf]
  %v69 = vld [vmem:[%s0 + $0xcc] sm:$0xf]
  %v70 = vld [vmem:[%s0 + $0xd0] sm:$0xf]
  %v71 = vld [vmem:[%s0 + $0xd4] sm:$0xf]
  %v72 = vld [vmem:[%s0 + $0xd8] sm:$0xf]
  %v73 = vld [vmem:[%s0 + $0xdc] sm:$0xf]
  %v74 = vld [vmem:[%s0 + $0xe0] sm:$0xf]
  %v75 = vld [vmem:[%s0 + $0xe4] sm:$0xf]
  %v76 = vld [vmem:[%s0 + $0xe8] sm:$0xf]
  %v77 = vld [vmem:[%s0 + $0xec] sm:$0xf]
  %v78 = vld [vmem:[%s0 + $0xf0] sm:$0xf]
  %v79 = vld [vmem:[%s0 + $0xf4] sm:$0xf]
  %v80 = vld [vmem:[%s0 + $0xf8] sm:$0xf]
  %v81 = vld [vmem:[%s0 + $0xfc] sm:$0xf]
  %v82 = vld [vmem:[%s1] sm:$0xf]
  %v83 = vld [vmem:[%s1 + $0x4] sm:$0xf]
  %v84 = vld [vmem:[%s1 + $0x8] sm:$0xf]
  %v85 = vld [vmem:[%s1 + $0xc] sm:$0x3]
  %v150 = vunpack.c.l.b16 %v18
  %v151 = vunpack.c.l.b16 %v19
  %v152 = vunpack.c.l.b16 %v20
  %v153 = vunpack.c.l.b16 %v21
  %v154 = vunpack.c.l.b16 %v22
  %v155 = vunpack.c.l.b16 %v23
  %v156 = vunpack.c.l.b16 %v24
  %v157 = vunpack.c.l.b16 %v25
  %v158 = vunpack.c.l.b16 %v26
  %v159 = vunpack.c.l.b16 %v27
  %v160 = vunpack.c.l.b16 %v28
  %v161 = vunpack.c.l.b16 %v29
  %v162 = vunpack.c.l.b16 %v30
  %v163 = vunpack.c.l.b16 %v31
  %v164 = vunpack.c.l.b16 %v32
  %v165 = vunpack.c.l.b16 %v33
  %v166 = vunpack.c.l.b16 %v34
  %v167 = vunpack.c.l.b16 %v35
  %v168 = vunpack.c.l.b16 %v36
  %v169 = vunpack.c.l.b16 %v37
  %v170 = vunpack.c.l.b16 %v38
  %v171 = vunpack.c.l.b16 %v39
  %v172 = vunpack.c.l.b16 %v40
  %v173 = vunpack.c.l.b16 %v41
  %v174 = vunpack.c.l.b16 %v42
  %v175 = vunpack.c.l.b16 %v43
  %v176 = vunpack.c.l.b16 %v44
  %v177 = vunpack.c.l.b16 %v45
  %v178 = vunpack.c.l.b16 %v46
  %v179 = vunpack.c.l.b16 %v47
  %v180 = vunpack.c.l.b16 %v48
  %v181 = vunpack.c.l.b16 %v49
  %v182 = vunpack.c.l.b16 %v50
  %v183 = vunpack.c.l.b16 %v51
  %v184 = vunpack.c.l.b16 %v52
  %v185 = vunpack.c.l.b16 %v53
  %v186 = vunpack.c.l.b16 %v54
  %v187 = vunpack.c.l.b16 %v55
  %v188 = vunpack.c.l.b16 %v56
  %v189 = vunpack.c.l.b16 %v57
  %v190 = vunpack.c.l.b16 %v58
  %v191 = vunpack.c.l.b16 %v59
  %v192 = vunpack.c.l.b16 %v60
  %v193 = vunpack.c.l.b16 %v61
  %v194 = vunpack.c.l.b16 %v62
  %v195 = vunpack.c.l.b16 %v63
  %v196 = vunpack.c.l.b16 %v64
  %v197 = vunpack.c.l.b16 %v65
  %v198 = vunpack.c.l.b16 %v66
  %v199 = vunpack.c.l.b16 %v67
  %v200 = vunpack.c.l.b16 %v68
  %v201 = vunpack.c.l.b16 %v69
  %v202 = vunpack.c.l.b16 %v70
  %v203 = vunpack.c.l.b16 %v71
  %v204 = vunpack.c.l.b16 %v72
  %v205 = vunpack.c.l.b16 %v73
  %v206 = vunpack.c.l.b16 %v74
  %v207 = vunpack.c.l.b16 %v75
  %v208 = vunpack.c.l.b16 %v76
  %v209 = vunpack.c.l.b16 %v77
  %v210 = vunpack.c.l.b16 %v78
  %v211 = vunpack.c.l.b16 %v79
  %v212 = vunpack.c.l.b16 %v80
  %v213 = vunpack.c.l.b16 %v81
  %v214 = vpack.c.b16 %v151, %v150
  %v215 = vpack.c.b16 %v153, %v152
  %v216 = vpack.c.b16 %v155, %v154
  %v217 = vpack.c.b16 %v157, %v156
  %v218 = vpack.c.b16 %v159, %v158
  %v219 = vpack.c.b16 %v161, %v160
  %v220 = vpack.c.b16 %v163, %v162
  %v221 = vpack.c.b16 %v165, %v164
  %v222 = vpack.c.b16 %v167, %v166
  %v223 = vpack.c.b16 %v169, %v168
  %v224 = vpack.c.b16 %v171, %v170
  %v225 = vpack.c.b16 %v173, %v172
  %v226 = vpack.c.b16 %v175, %v174
  %v227 = vpack.c.b16 %v177, %v176
  %v228 = vpack.c.b16 %v179, %v178
  %v229 = vpack.c.b16 %v181, %v180
  %v230 = vpack.c.b16 %v183, %v182
  %v231 = vpack.c.b16 %v185, %v184
  %v232 = vpack.c.b16 %v187, %v186
  %v233 = vpack.c.b16 %v189, %v188
  %v234 = vpack.c.b16 %v191, %v190
  %v235 = vpack.c.b16 %v193, %v192
  %v236 = vpack.c.b16 %v195, %v194
  %v237 = vpack.c.b16 %v197, %v196
  %v238 = vpack.c.b16 %v199, %v198
  %v239 = vpack.c.b16 %v201, %v200
  %v240 = vpack.c.b16 %v203, %v202
  %v241 = vpack.c.b16 %v205, %v204
  %v242 = vpack.c.b16 %v207, %v206
  %v243 = vpack.c.b16 %v209, %v208
  %v244 = vpack.c.b16 %v211, %v210
  %v245 = vpack.c.b16 %v213, %v212
  %v250 = vunpack.c.l.b16 %v82
  %v251 = vunpack.c.l.b16 %v83
  %v252 = vunpack.c.l.b16 %v84
  %v253 = vunpack.c.l.b16 %v85
  %v254 = vpack.c.b16 %v251, %v250
  %v255 = vpack.c.b16 %v253, %v252
  %vm257 = vcmask 220160
  %v259 = vsel %vm257, %v214, 0
  %v262 = vsel %vm257, %v215, 0
  %v265 = vsel %vm257, %v216, 0
  %v268 = vsel %vm257, %v217, 0
  %v271 = vsel %vm257, %v218, 0
  %v274 = vsel %vm257, %v219, 0
  %v277 = vsel %vm257, %v220, 0
  %v280 = vsel %vm257, %v221, 0
  %v283 = vsel %vm257, %v222, 0
  %v286 = vsel %vm257, %v223, 0
  %v289 = vsel %vm257, %v224, 0
  %v292 = vsel %vm257, %v225, 0
  %v295 = vsel %vm257, %v226, 0
  %v298 = vsel %vm257, %v227, 0
  %v301 = vsel %vm257, %v228, 0
  %v304 = vsel %vm257, %v229, 0
  %v307 = vsel %vm257, %v230, 0
  %v310 = vsel %vm257, %v231, 0
  %v313 = vsel %vm257, %v232, 0
  %v316 = vsel %vm257, %v233, 0
  %v319 = vsel %vm257, %v234, 0
  %v322 = vsel %vm257, %v235, 0
  %v325 = vsel %vm257, %v236, 0
  %v328 = vsel %vm257, %v237, 0
  %v331 = vsel %vm257, %v238, 0
  %v334 = vsel %vm257, %v239, 0
  %v337 = vsel %vm257, %v240, 0
  %v340 = vsel %vm257, %v241, 0
  %v343 = vsel %vm257, %v242, 0
  %v346 = vsel %vm257, %v243, 0
  %v349 = vsel %vm257, %v244, 0
  %v352 = vsel %vm257, %v245, 0
  %vm354 = vcmask 1044480
  %vm355 = vcmask 1045504
  %v356 = vsel %vm354, 4294967295, 65535
  %v357 = vsel %vm355, %v356, 0
  %v359 = vand.u32 %v255, %v357
  %361 = vmatprep.subr.bf16.mxu0 0
  %362 = vmatpush1.bf16.msra.mxu0 0
  %363 = vmatprep.subr.bf16.mxu0 0
  %364 = vmatpush1.bf16.msra.mxu0 0
  %365 = vmatprep.subr.bf16.mxu0 0
  %366 = vmatpush1.bf16.msra.mxu0 0
  %367 = vmatprep.subr.bf16.mxu0 0
  %368 = vmatpush1.bf16.msra.mxu0 0
  %369 = vmatprep.subr.bf16.mxu0 0
  %370 = vmatpush1.bf16.msra.mxu0 0
  %371 = vmatprep.subr.bf16.mxu0 0
  %372 = vmatpush1.bf16.msra.mxu0 0
  %373 = vmatprep.subr.bf16.mxu0 0
  %374 = vmatpush1.bf16.msra.mxu0 %v359
  %375 = vmatprep.subr.bf16.mxu0 0
  %376 = vmatpush1.bf16.msra.mxu0 %v254
  %377 = vmatprep.subr.bf16.mxu0 0
  %378 = vmatpush2.bf16.msra.mxu0 0
  %379 = vmatprep.subr.bf16.mxu0 0
  %380 = vmatpush2.bf16.msra.mxu0 0
  %381 = vmatprep.subr.bf16.mxu0 0
  %382 = vmatpush2.bf16.msra.mxu0 0
  %383 = vmatprep.subr.bf16.mxu0 0
  %384 = vmatpush2.bf16.msra.mxu0 0
  %385 = vmatprep.subr.bf16.mxu0 0
  %386 = vmatpush2.bf16.msra.mxu0 0
  %387 = vmatprep.subr.bf16.mxu0 0
  %388 = vmatpush2.bf16.msra.mxu0 0
  %389 = vmatprep.subr.bf16.mxu0 0
  %390 = vmatpush2.bf16.msra.mxu0 0
  %391 = vmatprep.subr.bf16.mxu0 0
  %392 = vmatpush2.bf16.msra.mxu0 0
  %393 = vmatprep.mubr.bf16.mxu0 0
  %394 = vmatmul.mubr.bf16.gmra.mxu0 %v259
  %v395 = vpop.f32.mrf.mxu0
  %v396 = vadd.f32 0.0, %v395
  %v397 = vpop.f32.mrf.mxu0
  %v398 = vpop.f32.mrf.mxu0
  %v399 = vadd.f32 0.0, %v398
  %v400 = vpop.f32.mrf.mxu0
  %401 = vmatprep.mubr.bf16.mxu0 0
  %402 = vmatmul.mubr.bf16.gmra.mxu0 %v262
  %v403 = vpop.f32.mrf.mxu0
  %v404 = vadd.f32 0.0, %v403
  %v405 = vpop.f32.mrf.mxu0
  %v406 = vpop.f32.mrf.mxu0
  %v407 = vadd.f32 0.0, %v406
  %v408 = vpop.f32.mrf.mxu0
  %409 = vmatprep.mubr.bf16.mxu0 0
  %410 = vmatmul.mubr.bf16.gmra.mxu0 %v265
  %v411 = vpop.f32.mrf.mxu0
  %v412 = vadd.f32 0.0, %v411
  %v413 = vpop.f32.mrf.mxu0
  %v414 = vpop.f32.mrf.mxu0
  %v415 = vadd.f32 0.0, %v414
  %v416 = vpop.f32.mrf.mxu0
  %417 = vmatprep.mubr.bf16.mxu0 0
  %418 = vmatmul.mubr.bf16.gmra.mxu0 %v268
  %v419 = vpop.f32.mrf.mxu0
  %v420 = vadd.f32 0.0, %v419
  %v421 = vpop.f32.mrf.mxu0
  %v422 = vpop.f32.mrf.mxu0
  %v423 = vadd.f32 0.0, %v422
  %v424 = vpop.f32.mrf.mxu0
  %425 = vmatprep.mubr.bf16.mxu0 0
  %426 = vmatmul.mubr.bf16.gmra.mxu0 %v271
  %v427 = vpop.f32.mrf.mxu0
  %v428 = vadd.f32 0.0, %v427
  %v429 = vpop.f32.mrf.mxu0
  %v430 = vpop.f32.mrf.mxu0
  %v431 = vadd.f32 0.0, %v430
  %v432 = vpop.f32.mrf.mxu0
  %433 = vmatprep.mubr.bf16.mxu0 0
  %434 = vmatmul.mubr.bf16.gmra.mxu0 %v274
  %v435 = vpop.f32.mrf.mxu0
  %v436 = vadd.f32 0.0, %v435
  %v437 = vpop.f32.mrf.mxu0
  %v438 = vpop.f32.mrf.mxu0
  %v439 = vadd.f32 0.0, %v438
  %v440 = vpop.f32.mrf.mxu0
  %441 = vmatprep.mubr.bf16.mxu0 0
  %442 = vmatmul.mubr.bf16.gmra.mxu0 %v277
  %v443 = vpop.f32.mrf.mxu0
  %v444 = vadd.f32 0.0, %v443
  %v445 = vpop.f32.mrf.mxu0
  %v446 = vpop.f32.mrf.mxu0
  %v447 = vadd.f32 0.0, %v446
  %v448 = vpop.f32.mrf.mxu0
  %449 = vmatprep.mubr.bf16.mxu0 0
  %450 = vmatmul.mubr.bf16.gmra.mxu0 %v280
  %v451 = vpop.f32.mrf.mxu0
  %v452 = vadd.f32 0.0, %v451
  %v453 = vpop.f32.mrf.mxu0
  %v454 = vpop.f32.mrf.mxu0
  %v455 = vadd.f32 0.0, %v454
  %v456 = vpop.f32.mrf.mxu0
  %457 = vmatprep.mubr.bf16.mxu0 0
  %458 = vmatmul.mubr.bf16.gmra.mxu0 %v283
  %v459 = vpop.f32.mrf.mxu0
  %v460 = vadd.f32 0.0, %v459
  %v461 = vpop.f32.mrf.mxu0
  %v462 = vpop.f32.mrf.mxu0
  %v463 = vadd.f32 0.0, %v462
  %v464 = vpop.f32.mrf.mxu0
  %465 = vmatprep.mubr.bf16.mxu0 0
  %466 = vmatmul.mubr.bf16.gmra.mxu0 %v286
  %v467 = vpop.f32.mrf.mxu0
  %v468 = vadd.f32 0.0, %v467
  %v469 = vpop.f32.mrf.mxu0
  %v470 = vpop.f32.mrf.mxu0
  %v471 = vadd.f32 0.0, %v470
  %v472 = vpop.f32.mrf.mxu0
  %473 = vmatprep.mubr.bf16.mxu0 0
  %474 = vmatmul.mubr.bf16.gmra.mxu0 %v289
  %v475 = vpop.f32.mrf.mxu0
  %v476 = vadd.f32 0.0, %v475
  %v477 = vpop.f32.mrf.mxu0
  %v478 = vpop.f32.mrf.mxu0
  %v479 = vadd.f32 0.0, %v478
  %v480 = vpop.f32.mrf.mxu0
  %481 = vmatprep.mubr.bf16.mxu0 0
  %482 = vmatmul.mubr.bf16.gmra.mxu0 %v292
  %v483 = vpop.f32.mrf.mxu0
  %v484 = vadd.f32 0.0, %v483
  %v485 = vpop.f32.mrf.mxu0
  %v486 = vpop.f32.mrf.mxu0
  %v487 = vadd.f32 0.0, %v486
  %v488 = vpop.f32.mrf.mxu0
  %489 = vmatprep.mubr.bf16.mxu0 0
  %490 = vmatmul.mubr.bf16.gmra.mxu0 %v295
  %v491 = vpop.f32.mrf.mxu0
  %v492 = vadd.f32 0.0, %v491
  %v493 = vpop.f32.mrf.mxu0
  %v494 = vpop.f32.mrf.mxu0
  %v495 = vadd.f32 0.0, %v494
  %v496 = vpop.f32.mrf.mxu0
  %497 = vmatprep.mubr.bf16.mxu0 0
  %498 = vmatmul.mubr.bf16.gmra.mxu0 %v298
  %v499 = vpop.f32.mrf.mxu0
  %v500 = vadd.f32 0.0, %v499
  %v501 = vpop.f32.mrf.mxu0
  %v502 = vpop.f32.mrf.mxu0
  %v503 = vadd.f32 0.0, %v502
  %v504 = vpop.f32.mrf.mxu0
  %505 = vmatprep.mubr.bf16.mxu0 0
  %506 = vmatmul.mubr.bf16.gmra.mxu0 %v301
  %v507 = vpop.f32.mrf.mxu0
  %v508 = vadd.f32 0.0, %v507
  %v509 = vpop.f32.mrf.mxu0
  %v510 = vpop.f32.mrf.mxu0
  %v511 = vadd.f32 0.0, %v510
  %v512 = vpop.f32.mrf.mxu0
  %513 = vmatprep.mubr.bf16.mxu0 0
  %514 = vmatmul.mubr.bf16.gmra.mxu0 %v304
  %v515 = vpop.f32.mrf.mxu0
  %v516 = vadd.f32 0.0, %v515
  %v517 = vpop.f32.mrf.mxu0
  %v518 = vpop.f32.mrf.mxu0
  %v519 = vadd.f32 0.0, %v518
  %v520 = vpop.f32.mrf.mxu0
  %521 = vmatprep.mubr.bf16.mxu0 0
  %522 = vmatmul.mubr.bf16.gmra.mxu0 %v307
  %v523 = vpop.f32.mrf.mxu0
  %v524 = vadd.f32 0.0, %v523
  %v525 = vpop.f32.mrf.mxu0
  %v526 = vpop.f32.mrf.mxu0
  %v527 = vadd.f32 0.0, %v526
  %v528 = vpop.f32.mrf.mxu0
  %529 = vmatprep.mubr.bf16.mxu0 0
  %530 = vmatmul.mubr.bf16.gmra.mxu0 %v310
  %v531 = vpop.f32.mrf.mxu0
  %v532 = vadd.f32 0.0, %v531
  %v533 = vpop.f32.mrf.mxu0
  %v534 = vpop.f32.mrf.mxu0
  %v535 = vadd.f32 0.0, %v534
  %v536 = vpop.f32.mrf.mxu0
  %537 = vmatprep.mubr.bf16.mxu0 0
  %538 = vmatmul.mubr.bf16.gmra.mxu0 %v313
  %v539 = vpop.f32.mrf.mxu0
  %v540 = vadd.f32 0.0, %v539
  %v541 = vpop.f32.mrf.mxu0
  %v542 = vpop.f32.mrf.mxu0
  %v543 = vadd.f32 0.0, %v542
  %v544 = vpop.f32.mrf.mxu0
  %545 = vmatprep.mubr.bf16.mxu0 0
  %546 = vmatmul.mubr.bf16.gmra.mxu0 %v316
  %v547 = vpop.f32.mrf.mxu0
  %v548 = vadd.f32 0.0, %v547
  %v549 = vpop.f32.mrf.mxu0
  %v550 = vpop.f32.mrf.mxu0
  %v551 = vadd.f32 0.0, %v550
  %v552 = vpop.f32.mrf.mxu0
  %553 = vmatprep.mubr.bf16.mxu0 0
  %554 = vmatmul.mubr.bf16.gmra.mxu0 %v319
  %v555 = vpop.f32.mrf.mxu0
  %v556 = vadd.f32 0.0, %v555
  %v557 = vpop.f32.mrf.mxu0
  %v558 = vpop.f32.mrf.mxu0
  %v559 = vadd.f32 0.0, %v558
  %v560 = vpop.f32.mrf.mxu0
  %561 = vmatprep.mubr.bf16.mxu0 0
  %562 = vmatmul.mubr.bf16.gmra.mxu0 %v322
  %v563 = vpop.f32.mrf.mxu0
  %v564 = vadd.f32 0.0, %v563
  %v565 = vpop.f32.mrf.mxu0
  %v566 = vpop.f32.mrf.mxu0
  %v567 = vadd.f32 0.0, %v566
  %v568 = vpop.f32.mrf.mxu0
  %569 = vmatprep.mubr.bf16.mxu0 0
  %570 = vmatmul.mubr.bf16.gmra.mxu0 %v325
  %v571 = vpop.f32.mrf.mxu0
  %v572 = vadd.f32 0.0, %v571
  %v573 = vpop.f32.mrf.mxu0
  %v574 = vpop.f32.mrf.mxu0
  %v575 = vadd.f32 0.0, %v574
  %v576 = vpop.f32.mrf.mxu0
  %577 = vmatprep.mubr.bf16.mxu0 0
  %578 = vmatmul.mubr.bf16.gmra.mxu0 %v328
  %v579 = vpop.f32.mrf.mxu0
  %v580 = vadd.f32 0.0, %v579
  %v581 = vpop.f32.mrf.mxu0
  %v582 = vpop.f32.mrf.mxu0
  %v583 = vadd.f32 0.0, %v582
  %v584 = vpop.f32.mrf.mxu0
  %585 = vmatprep.mubr.bf16.mxu0 0
  %586 = vmatmul.mubr.bf16.gmra.mxu0 %v331
  %v587 = vpop.f32.mrf.mxu0
  %v588 = vadd.f32 0.0, %v587
  %v589 = vpop.f32.mrf.mxu0
  %v590 = vpop.f32.mrf.mxu0
  %v591 = vadd.f32 0.0, %v590
  %v592 = vpop.f32.mrf.mxu0
  %593 = vmatprep.mubr.bf16.mxu0 0
  %594 = vmatmul.mubr.bf16.gmra.mxu0 %v334
  %v595 = vpop.f32.mrf.mxu0
  %v596 = vadd.f32 0.0, %v595
  %v597 = vpop.f32.mrf.mxu0
  %v598 = vpop.f32.mrf.mxu0
  %v599 = vadd.f32 0.0, %v598
  %v600 = vpop.f32.mrf.mxu0
  %601 = vmatprep.mubr.bf16.mxu0 0
  %602 = vmatmul.mubr.bf16.gmra.mxu0 %v337
  %v603 = vpop.f32.mrf.mxu0
  %v604 = vadd.f32 0.0, %v603
  %v605 = vpop.f32.mrf.mxu0
  %v606 = vpop.f32.mrf.mxu0
  %v607 = vadd.f32 0.0, %v606
  %v608 = vpop.f32.mrf.mxu0
  %609 = vmatprep.mubr.bf16.mxu0 0
  %610 = vmatmul.mubr.bf16.gmra.mxu0 %v340
  %v611 = vpop.f32.mrf.mxu0
  %v612 = vadd.f32 0.0, %v611
  %v613 = vpop.f32.mrf.mxu0
  %v614 = vpop.f32.mrf.mxu0
  %v615 = vadd.f32 0.0, %v614
  %v616 = vpop.f32.mrf.mxu0
  %617 = vmatprep.mubr.bf16.mxu0 0
  %618 = vmatmul.mubr.bf16.gmra.mxu0 %v343
  %v619 = vpop.f32.mrf.mxu0
  %v620 = vadd.f32 0.0, %v619
  %v621 = vpop.f32.mrf.mxu0
  %v622 = vpop.f32.mrf.mxu0
  %v623 = vadd.f32 0.0, %v622
  %v624 = vpop.f32.mrf.mxu0
  %625 = vmatprep.mubr.bf16.mxu0 0
  %626 = vmatmul.mubr.bf16.gmra.mxu0 %v346
  %v627 = vpop.f32.mrf.mxu0
  %v628 = vadd.f32 0.0, %v627
  %v629 = vpop.f32.mrf.mxu0
  %v630 = vpop.f32.mrf.mxu0
  %v631 = vadd.f32 0.0, %v630
  %v632 = vpop.f32.mrf.mxu0
  %633 = vmatprep.mubr.bf16.mxu0 0
  %634 = vmatmul.mubr.bf16.gmra.mxu0 %v349
  %v635 = vpop.f32.mrf.mxu0
  %v636 = vadd.f32 0.0, %v635
  %v637 = vpop.f32.mrf.mxu0
  %v638 = vpop.f32.mrf.mxu0
  %v639 = vadd.f32 0.0, %v638
  %v640 = vpop.f32.mrf.mxu0
  %641 = vmatprep.mubr.bf16.mxu0 0
  %642 = vmatmul.mubr.bf16.gmra.mxu0 %v352
  %v643 = vpop.f32.mrf.mxu0
  %v644 = vadd.f32 0.0, %v643
  %v645 = vpop.f32.mrf.mxu0
  %v646 = vpop.f32.mrf.mxu0
  %v647 = vadd.f32 0.0, %v646
  %v648 = vpop.f32.mrf.mxu0
  %649 = vdwg.mxu0
  %v650 = vld [vmem:[%s2] sm:$0x1]
  %v652 = vlaneseq
  %v653 = vshrl.u32 %v652, 7
  %v654 = vsub.s32 0, %v653
  %v655 = vrot.slane %v650, %v654
  %v657 = vmul.f32 %v396, %v655
  %v658 = vmul.f32 %v399, %v655
  %v659 = vmul.f32 %v404, %v655
  %v660 = vmul.f32 %v407, %v655
  %v661 = vmul.f32 %v412, %v655
  %v662 = vmul.f32 %v415, %v655
  %v663 = vmul.f32 %v420, %v655
  %v664 = vmul.f32 %v423, %v655
  %v665 = vmul.f32 %v428, %v655
  %v666 = vmul.f32 %v431, %v655
  %v667 = vmul.f32 %v436, %v655
  %v668 = vmul.f32 %v439, %v655
  %v669 = vmul.f32 %v444, %v655
  %v670 = vmul.f32 %v447, %v655
  %v671 = vmul.f32 %v452, %v655
  %v672 = vmul.f32 %v455, %v655
  %v673 = vmul.f32 %v460, %v655
  %v674 = vmul.f32 %v463, %v655
  %v675 = vmul.f32 %v468, %v655
  %v676 = vmul.f32 %v471, %v655
  %v677 = vmul.f32 %v476, %v655
  %v678 = vmul.f32 %v479, %v655
  %v679 = vmul.f32 %v484, %v655
  %v680 = vmul.f32 %v487, %v655
  %v681 = vmul.f32 %v492, %v655
  %v682 = vmul.f32 %v495, %v655
  %v683 = vmul.f32 %v500, %v655
  %v684 = vmul.f32 %v503, %v655
  %v685 = vmul.f32 %v508, %v655
  %v686 = vmul.f32 %v511, %v655
  %v687 = vmul.f32 %v516, %v655
  %v688 = vmul.f32 %v519, %v655
  %v689 = vmul.f32 %v524, %v655
  %v690 = vmul.f32 %v527, %v655
  %v691 = vmul.f32 %v532, %v655
  %v692 = vmul.f32 %v535, %v655
  %v693 = vmul.f32 %v540, %v655
  %v694 = vmul.f32 %v543, %v655
  %v695 = vmul.f32 %v548, %v655
  %v696 = vmul.f32 %v551, %v655
  %v697 = vmul.f32 %v556, %v655
  %v698 = vmul.f32 %v559, %v655
  %v699 = vmul.f32 %v564, %v655
  %v700 = vmul.f32 %v567, %v655
  %v701 = vmul.f32 %v572, %v655
  %v702 = vmul.f32 %v575, %v655
  %v703 = vmul.f32 %v580, %v655
  %v704 = vmul.f32 %v583, %v655
  %v705 = vmul.f32 %v588, %v655
  %v706 = vmul.f32 %v591, %v655
  %v707 = vmul.f32 %v596, %v655
  %v708 = vmul.f32 %v599, %v655
  %v709 = vmul.f32 %v604, %v655
  %v710 = vmul.f32 %v607, %v655
  %v711 = vmul.f32 %v612, %v655
  %v712 = vmul.f32 %v615, %v655
  %v713 = vmul.f32 %v620, %v655
  %v714 = vmul.f32 %v623, %v655
  %v715 = vmul.f32 %v628, %v655
  %v716 = vmul.f32 %v631, %v655
  %v717 = vmul.f32 %v636, %v655
  %v718 = vmul.f32 %v639, %v655
  %v719 = vmul.f32 %v644, %v655
  %v720 = vmul.f32 %v647, %v655
  %v721 = vld [vmem:[%s3] sm:$0x1]
  %v723 = vlaneseq
  %v724 = vshrl.u32 %v723, 7
  %v725 = vsub.s32 0, %v724
  %v726 = vrot.slane %v721, %v725
  %v728 = vadd.f32 %v657, %v726
  %v729 = vadd.f32 %v658, %v726
  %v730 = vadd.f32 %v659, %v726
  %v731 = vadd.f32 %v660, %v726
  %v732 = vadd.f32 %v661, %v726
  %v733 = vadd.f32 %v662, %v726
  %v734 = vadd.f32 %v663, %v726
  %v735 = vadd.f32 %v664, %v726
  %v736 = vadd.f32 %v665, %v726
  %v737 = vadd.f32 %v666, %v726
  %v738 = vadd.f32 %v667, %v726
  %v739 = vadd.f32 %v668, %v726
  %v740 = vadd.f32 %v669, %v726
  %v741 = vadd.f32 %v670, %v726
  %v742 = vadd.f32 %v671, %v726
  %v743 = vadd.f32 %v672, %v726
  %v744 = vadd.f32 %v673, %v726
  %v745 = vadd.f32 %v674, %v726
  %v746 = vadd.f32 %v675, %v726
  %v747 = vadd.f32 %v676, %v726
  %v748 = vadd.f32 %v677, %v726
  %v749 = vadd.f32 %v678, %v726
  %v750 = vadd.f32 %v679, %v726
  %v751 = vadd.f32 %v680, %v726
  %v752 = vadd.f32 %v681, %v726
  %v753 = vadd.f32 %v682, %v726
  %v754 = vadd.f32 %v683, %v726
  %v755 = vadd.f32 %v684, %v726
  %v756 = vadd.f32 %v685, %v726
  %v757 = vadd.f32 %v686, %v726
  %v758 = vadd.f32 %v687, %v726
  %v759 = vadd.f32 %v688, %v726
  %v760 = vadd.f32 %v689, %v726
  %v761 = vadd.f32 %v690, %v726
  %v762 = vadd.f32 %v691, %v726
  %v763 = vadd.f32 %v692, %v726
  %v764 = vadd.f32 %v693, %v726
  %v765 = vadd.f32 %v694, %v726
  %v766 = vadd.f32 %v695, %v726
  %v767 = vadd.f32 %v696, %v726
  %v768 = vadd.f32 %v697, %v726
  %v769 = vadd.f32 %v698, %v726
  %v770 = vadd.f32 %v699, %v726
  %v771 = vadd.f32 %v700, %v726
  %v772 = vadd.f32 %v701, %v726
  %v773 = vadd.f32 %v702, %v726
  %v774 = vadd.f32 %v703, %v726
  %v775 = vadd.f32 %v704, %v726
  %v776 = vadd.f32 %v705, %v726
  %v777 = vadd.f32 %v706, %v726
  %v778 = vadd.f32 %v707, %v726
  %v779 = vadd.f32 %v708, %v726
  %v780 = vadd.f32 %v709, %v726
  %v781 = vadd.f32 %v710, %v726
  %v782 = vadd.f32 %v711, %v726
  %v783 = vadd.f32 %v712, %v726
  %v784 = vadd.f32 %v713, %v726
  %v785 = vadd.f32 %v714, %v726
  %v786 = vadd.f32 %v715, %v726
  %v787 = vadd.f32 %v716, %v726
  %v788 = vadd.f32 %v717, %v726
  %v789 = vadd.f32 %v718, %v726
  %v790 = vadd.f32 %v719, %v726
  %v791 = vadd.f32 %v720, %v726
  %v792 = vsub.f32 0.0, %v728
  %v793 = vsub.f32 0.0, %v729
  %v794 = vsub.f32 0.0, %v730
  %v795 = vsub.f32 0.0, %v731
  %v796 = vsub.f32 0.0, %v732
  %v797 = vsub.f32 0.0, %v733
  %v798 = vsub.f32 0.0, %v734
  %v799 = vsub.f32 0.0, %v735
  %v800 = vsub.f32 0.0, %v736
  %v801 = vsub.f32 0.0, %v737
  %v802 = vsub.f32 0.0, %v738
  %v803 = vsub.f32 0.0, %v739
  %v804 = vsub.f32 0.0, %v740
  %v805 = vsub.f32 0.0, %v741
  %v806 = vsub.f32 0.0, %v742
  %v807 = vsub.f32 0.0, %v743
  %v808 = vsub.f32 0.0, %v744
  %v809 = vsub.f32 0.0, %v745
  %v810 = vsub.f32 0.0, %v746
  %v811 = vsub.f32 0.0, %v747
  %v812 = vsub.f32 0.0, %v748
  %v813 = vsub.f32 0.0, %v749
  %v814 = vsub.f32 0.0, %v750
  %v815 = vsub.f32 0.0, %v751
  %v816 = vsub.f32 0.0, %v752
  %v817 = vsub.f32 0.0, %v753
  %v818 = vsub.f32 0.0, %v754
  %v819 = vsub.f32 0.0, %v755
  %v820 = vsub.f32 0.0, %v756
  %v821 = vsub.f32 0.0, %v757
  %v822 = vsub.f32 0.0, %v758
  %v823 = vsub.f32 0.0, %v759
  %v824 = vsub.f32 0.0, %v760
  %v825 = vsub.f32 0.0, %v761
  %v826 = vsub.f32 0.0, %v762
  %v827 = vsub.f32 0.0, %v763
  %v828 = vsub.f32 0.0, %v764
  %v829 = vsub.f32 0.0, %v765
  %v830 = vsub.f32 0.0, %v766
  %v831 = vsub.f32 0.0, %v767
  %v832 = vsub.f32 0.0, %v768
  %v833 = vsub.f32 0.0, %v769
  %v834 = vsub.f32 0.0, %v770
  %v835 = vsub.f32 0.0, %v771
  %v836 = vsub.f32 0.0, %v772
  %v837 = vsub.f32 0.0, %v773
  %v838 = vsub.f32 0.0, %v774
  %v839 = vsub.f32 0.0, %v775
  %v840 = vsub.f32 0.0, %v776
  %v841 = vsub.f32 0.0, %v777
  %v842 = vsub.f32 0.0, %v778
  %v843 = vsub.f32 0.0, %v779
  %v844 = vsub.f32 0.0, %v780
  %v845 = vsub.f32 0.0, %v781
  %v846 = vsub.f32 0.0, %v782
  %v847 = vsub.f32 0.0, %v783
  %v848 = vsub.f32 0.0, %v784
  %v849 = vsub.f32 0.0, %v785
  %v850 = vsub.f32 0.0, %v786
  %v851 = vsub.f32 0.0, %v787
  %v852 = vsub.f32 0.0, %v788
  %v853 = vsub.f32 0.0, %v789
  %v854 = vsub.f32 0.0, %v790
  %v855 = vsub.f32 0.0, %v791
  %v856 = vmul.f32 %v792, 1.442695
  %v857 = vpow.pop %v856
  %v858 = vmul.f32 %v793, 1.442695
  %v859 = vpow.pop %v858
  %v860 = vmul.f32 %v794, 1.442695
  %v861 = vpow.pop %v860
  %v862 = vmul.f32 %v795, 1.442695
  %v863 = vpow.pop %v862
  %v864 = vmul.f32 %v796, 1.442695
  %v865 = vpow.pop %v864
  %v866 = vmul.f32 %v797, 1.442695
  %v867 = vpow.pop %v866
  %v868 = vmul.f32 %v798, 1.442695
  %v869 = vpow.pop %v868
  %v870 = vmul.f32 %v799, 1.442695
  %v871 = vpow.pop %v870
  %v872 = vmul.f32 %v800, 1.442695
  %v873 = vpow.pop %v872
  %v874 = vmul.f32 %v801, 1.442695
  %v875 = vpow.pop %v874
  %v876 = vmul.f32 %v802, 1.442695
  %v877 = vpow.pop %v876
  %v878 = vmul.f32 %v803, 1.442695
  %v879 = vpow.pop %v878
  %v880 = vmul.f32 %v804, 1.442695
  %v881 = vpow.pop %v880
  %v882 = vmul.f32 %v805, 1.442695
  %v883 = vpow.pop %v882
  %v884 = vmul.f32 %v806, 1.442695
  %v885 = vpow.pop %v884
  %v886 = vmul.f32 %v807, 1.442695
  %v887 = vpow.pop %v886
  %v888 = vmul.f32 %v808, 1.442695
  %v889 = vpow.pop %v888
  %v890 = vmul.f32 %v809, 1.442695
  %v891 = vpow.pop %v890
  %v892 = vmul.f32 %v810, 1.442695
  %v893 = vpow.pop %v892
  %v894 = vmul.f32 %v811, 1.442695
  %v895 = vpow.pop %v894
  %v896 = vmul.f32 %v812, 1.442695
  %v897 = vpow.pop %v896
  %v898 = vmul.f32 %v813, 1.442695
  %v899 = vpow.pop %v898
  %v900 = vmul.f32 %v814, 1.442695
  %v901 = vpow.pop %v900
  %v902 = vmul.f32 %v815, 1.442695
  %v903 = vpow.pop %v902
  %v904 = vmul.f32 %v816, 1.442695
  %v905 = vpow.pop %v904
  %v906 = vmul.f32 %v817, 1.442695
  %v907 = vpow.pop %v906
  %v908 = vmul.f32 %v818, 1.442695
  %v909 = vpow.pop %v908
  %v910 = vmul.f32 %v819, 1.442695
  %v911 = vpow.pop %v910
  %v912 = vmul.f32 %v820, 1.442695
  %v913 = vpow.pop %v912
  %v914 = vmul.f32 %v821, 1.442695
  %v915 = vpow.pop %v914
  %v916 = vmul.f32 %v822, 1.442695
  %v917 = vpow.pop %v916
  %v918 = vmul.f32 %v823, 1.442695
  %v919 = vpow.pop %v918
  %v920 = vmul.f32 %v824, 1.442695
  %v921 = vpow.pop %v920
  %v922 = vmul.f32 %v825, 1.442695
  %v923 = vpow.pop %v922
  %v924 = vmul.f32 %v826, 1.442695
  %v925 = vpow.pop %v924
  %v926 = vmul.f32 %v827, 1.442695
  %v927 = vpow.pop %v926
  %v928 = vmul.f32 %v828, 1.442695
  %v929 = vpow.pop %v928
  %v930 = vmul.f32 %v829, 1.442695
  %v931 = vpow.pop %v930
  %v932 = vmul.f32 %v830, 1.442695
  %v933 = vpow.pop %v932
  %v934 = vmul.f32 %v831, 1.442695
  %v935 = vpow.pop %v934
  %v936 = vmul.f32 %v832, 1.442695
  %v937 = vpow.pop %v936
  %v938 = vmul.f32 %v833, 1.442695
  %v939 = vpow.pop %v938
  %v940 = vmul.f32 %v834, 1.442695
  %v941 = vpow.pop %v940
  %v942 = vmul.f32 %v835, 1.442695
  %v943 = vpow.pop %v942
  %v944 = vmul.f32 %v836, 1.442695
  %v945 = vpow.pop %v944
  %v946 = vmul.f32 %v837, 1.442695
  %v947 = vpow.pop %v946
  %v948 = vmul.f32 %v838, 1.442695
  %v949 = vpow.pop %v948
  %v950 = vmul.f32 %v839, 1.442695
  %v951 = vpow.pop %v950
  %v952 = vmul.f32 %v840, 1.442695
  %v953 = vpow.pop %v952
  %v954 = vmul.f32 %v841, 1.442695
  %v955 = vpow.pop %v954
  %v956 = vmul.f32 %v842, 1.442695
  %v957 = vpow.pop %v956
  %v958 = vmul.f32 %v843, 1.442695
  %v959 = vpow.pop %v958
  %v960 = vmul.f32 %v844, 1.442695
  %v961 = vpow.pop %v960
  %v962 = vmul.f32 %v845, 1.442695
  %v963 = vpow.pop %v962
  %v964 = vmul.f32 %v846, 1.442695
  %v965 = vpow.pop %v964
  %v966 = vmul.f32 %v847, 1.442695
  %v967 = vpow.pop %v966
  %v968 = vmul.f32 %v848, 1.442695
  %v969 = vpow.pop %v968
  %v970 = vmul.f32 %v849, 1.442695
  %v971 = vpow.pop %v970
  %v972 = vmul.f32 %v850, 1.442695
  %v973 = vpow.pop %v972
  %v974 = vmul.f32 %v851, 1.442695
  %v975 = vpow.pop %v974
  %v976 = vmul.f32 %v852, 1.442695
  %v977 = vpow.pop %v976
  %v978 = vmul.f32 %v853, 1.442695
  %v979 = vpow.pop %v978
  %v980 = vmul.f32 %v854, 1.442695
  %v981 = vpow.pop %v980
  %v982 = vmul.f32 %v855, 1.442695
  %v983 = vpow.pop %v982
  %v984 = vadd.f32 %v857, 1.0
  %v985 = vadd.f32 %v859, 1.0
  %v986 = vadd.f32 %v861, 1.0
  %v987 = vadd.f32 %v863, 1.0
  %v988 = vadd.f32 %v865, 1.0
  %v989 = vadd.f32 %v867, 1.0
  %v990 = vadd.f32 %v869, 1.0
  %v991 = vadd.f32 %v871, 1.0
  %v992 = vadd.f32 %v873, 1.0
  %v993 = vadd.f32 %v875, 1.0
  %v994 = vadd.f32 %v877, 1.0
  %v995 = vadd.f32 %v879, 1.0
  %v996 = vadd.f32 %v881, 1.0
  %v997 = vadd.f32 %v883, 1.0
  %v998 = vadd.f32 %v885, 1.0
  %v999 = vadd.f32 %v887, 1.0
  %v1000 = vadd.f32 %v889, 1.0
  %v1001 = vadd.f32 %v891, 1.0
  %v1002 = vadd.f32 %v893, 1.0
  %v1003 = vadd.f32 %v895, 1.0
  %v1004 = vadd.f32 %v897, 1.0
  %v1005 = vadd.f32 %v899, 1.0
  %v1006 = vadd.f32 %v901, 1.0
  %v1007 = vadd.f32 %v903, 1.0
  %v1008 = vadd.f32 %v905, 1.0
  %v1009 = vadd.f32 %v907, 1.0
  %v1010 = vadd.f32 %v909, 1.0
  %v1011 = vadd.f32 %v911, 1.0
  %v1012 = vadd.f32 %v913, 1.0
  %v1013 = vadd.f32 %v915, 1.0
  %v1014 = vadd.f32 %v917, 1.0
  %v1015 = vadd.f32 %v919, 1.0
  %v1016 = vadd.f32 %v921, 1.0
  %v1017 = vadd.f32 %v923, 1.0
  %v1018 = vadd.f32 %v925, 1.0
  %v1019 = vadd.f32 %v927, 1.0
  %v1020 = vadd.f32 %v929, 1.0
  %v1021 = vadd.f32 %v931, 1.0
  %v1022 = vadd.f32 %v933, 1.0
  %v1023 = vadd.f32 %v935, 1.0
  %v1024 = vadd.f32 %v937, 1.0
  %v1025 = vadd.f32 %v939, 1.0
  %v1026 = vadd.f32 %v941, 1.0
  %v1027 = vadd.f32 %v943, 1.0
  %v1028 = vadd.f32 %v945, 1.0
  %v1029 = vadd.f32 %v947, 1.0
  %v1030 = vadd.f32 %v949, 1.0
  %v1031 = vadd.f32 %v951, 1.0
  %v1032 = vadd.f32 %v953, 1.0
  %v1033 = vadd.f32 %v955, 1.0
  %v1034 = vadd.f32 %v957, 1.0
  %v1035 = vadd.f32 %v959, 1.0
  %v1036 = vadd.f32 %v961, 1.0
  %v1037 = vadd.f32 %v963, 1.0
  %v1038 = vadd.f32 %v965, 1.0
  %v1039 = vadd.f32 %v967, 1.0
  %v1040 = vadd.f32 %v969, 1.0
  %v1041 = vadd.f32 %v971, 1.0
  %v1042 = vadd.f32 %v973, 1.0
  %v1043 = vadd.f32 %v975, 1.0
  %v1044 = vadd.f32 %v977, 1.0
  %v1045 = vadd.f32 %v979, 1.0
  %v1046 = vadd.f32 %v981, 1.0
  %v1047 = vadd.f32 %v983, 1.0
  %v1048 = vrcp.pop %v984
  %v1049 = vmul.f32 1.0, %v1048
  %v1050 = vrcp.pop %v985
  %v1051 = vmul.f32 1.0, %v1050
  %v1052 = vrcp.pop %v986
  %v1053 = vmul.f32 1.0, %v1052
  %v1054 = vrcp.pop %v987
  %v1055 = vmul.f32 1.0, %v1054
  %v1056 = vrcp.pop %v988
  %v1057 = vmul.f32 1.0, %v1056
  %v1058 = vrcp.pop %v989
  %v1059 = vmul.f32 1.0, %v1058
  %v1060 = vrcp.pop %v990
  %v1061 = vmul.f32 1.0, %v1060
  %v1062 = vrcp.pop %v991
  %v1063 = vmul.f32 1.0, %v1062
  %v1064 = vrcp.pop %v992
  %v1065 = vmul.f32 1.0, %v1064
  %v1066 = vrcp.pop %v993
  %v1067 = vmul.f32 1.0, %v1066
  %v1068 = vrcp.pop %v994
  %v1069 = vmul.f32 1.0, %v1068
  %v1070 = vrcp.pop %v995
  %v1071 = vmul.f32 1.0, %v1070
  %v1072 = vrcp.pop %v996
  %v1073 = vmul.f32 1.0, %v1072
  %v1074 = vrcp.pop %v997
  %v1075 = vmul.f32 1.0, %v1074
  %v1076 = vrcp.pop %v998
  %v1077 = vmul.f32 1.0, %v1076
  %v1078 = vrcp.pop %v999
  %v1079 = vmul.f32 1.0, %v1078
  %v1080 = vrcp.pop %v1000
  %v1081 = vmul.f32 1.0, %v1080
  %v1082 = vrcp.pop %v1001
  %v1083 = vmul.f32 1.0, %v1082
  %v1084 = vrcp.pop %v1002
  %v1085 = vmul.f32 1.0, %v1084
  %v1086 = vrcp.pop %v1003
  %v1087 = vmul.f32 1.0, %v1086
  %v1088 = vrcp.pop %v1004
  %v1089 = vmul.f32 1.0, %v1088
  %v1090 = vrcp.pop %v1005
  %v1091 = vmul.f32 1.0, %v1090
  %v1092 = vrcp.pop %v1006
  %v1093 = vmul.f32 1.0, %v1092
  %v1094 = vrcp.pop %v1007
  %v1095 = vmul.f32 1.0, %v1094
  %v1096 = vrcp.pop %v1008
  %v1097 = vmul.f32 1.0, %v1096
  %v1098 = vrcp.pop %v1009
  %v1099 = vmul.f32 1.0, %v1098
  %v1100 = vrcp.pop %v1010
  %v1101 = vmul.f32 1.0, %v1100
  %v1102 = vrcp.pop %v1011
  %v1103 = vmul.f32 1.0, %v1102
  %v1104 = vrcp.pop %v1012
  %v1105 = vmul.f32 1.0, %v1104
  %v1106 = vrcp.pop %v1013
  %v1107 = vmul.f32 1.0, %v1106
  %v1108 = vrcp.pop %v1014
  %v1109 = vmul.f32 1.0, %v1108
  %v1110 = vrcp.pop %v1015
  %v1111 = vmul.f32 1.0, %v1110
  %v1112 = vrcp.pop %v1016
  %v1113 = vmul.f32 1.0, %v1112
  %v1114 = vrcp.pop %v1017
  %v1115 = vmul.f32 1.0, %v1114
  %v1116 = vrcp.pop %v1018
  %v1117 = vmul.f32 1.0, %v1116
  %v1118 = vrcp.pop %v1019
  %v1119 = vmul.f32 1.0, %v1118
  %v1120 = vrcp.pop %v1020
  %v1121 = vmul.f32 1.0, %v1120
  %v1122 = vrcp.pop %v1021
  %v1123 = vmul.f32 1.0, %v1122
  %v1124 = vrcp.pop %v1022
  %v1125 = vmul.f32 1.0, %v1124
  %v1126 = vrcp.pop %v1023
  %v1127 = vmul.f32 1.0, %v1126
  %v1128 = vrcp.pop %v1024
  %v1129 = vmul.f32 1.0, %v1128
  %v1130 = vrcp.pop %v1025
  %v1131 = vmul.f32 1.0, %v1130
  %v1132 = vrcp.pop %v1026
  %v1133 = vmul.f32 1.0, %v1132
  %v1134 = vrcp.pop %v1027
  %v1135 = vmul.f32 1.0, %v1134
  %v1136 = vrcp.pop %v1028
  %v1137 = vmul.f32 1.0, %v1136
  %v1138 = vrcp.pop %v1029
  %v1139 = vmul.f32 1.0, %v1138
  %v1140 = vrcp.pop %v1030
  %v1141 = vmul.f32 1.0, %v1140
  %v1142 = vrcp.pop %v1031
  %v1143 = vmul.f32 1.0, %v1142
  %v1144 = vrcp.pop %v1032
  %v1145 = vmul.f32 1.0, %v1144
  %v1146 = vrcp.pop %v1033
  %v1147 = vmul.f32 1.0, %v1146
  %v1148 = vrcp.pop %v1034
  %v1149 = vmul.f32 1.0, %v1148
  %v1150 = vrcp.pop %v1035
  %v1151 = vmul.f32 1.0, %v1150
  %v1152 = vrcp.pop %v1036
  %v1153 = vmul.f32 1.0, %v1152
  %v1154 = vrcp.pop %v1037
  %v1155 = vmul.f32 1.0, %v1154
  %v1156 = vrcp.pop %v1038
  %v1157 = vmul.f32 1.0, %v1156
  %v1158 = vrcp.pop %v1039
  %v1159 = vmul.f32 1.0, %v1158
  %v1160 = vrcp.pop %v1040
  %v1161 = vmul.f32 1.0, %v1160
  %v1162 = vrcp.pop %v1041
  %v1163 = vmul.f32 1.0, %v1162
  %v1164 = vrcp.pop %v1042
  %v1165 = vmul.f32 1.0, %v1164
  %v1166 = vrcp.pop %v1043
  %v1167 = vmul.f32 1.0, %v1166
  %v1168 = vrcp.pop %v1044
  %v1169 = vmul.f32 1.0, %v1168
  %v1170 = vrcp.pop %v1045
  %v1171 = vmul.f32 1.0, %v1170
  %v1172 = vrcp.pop %v1046
  %v1173 = vmul.f32 1.0, %v1172
  %v1174 = vrcp.pop %v1047
  %v1175 = vmul.f32 1.0, %v1174
  %v1176 = vmul.f32 %v728, %v1049
  %v1177 = vmul.f32 %v729, %v1051
  %v1178 = vmul.f32 %v730, %v1053
  %v1179 = vmul.f32 %v731, %v1055
  %v1180 = vmul.f32 %v732, %v1057
  %v1181 = vmul.f32 %v733, %v1059
  %v1182 = vmul.f32 %v734, %v1061
  %v1183 = vmul.f32 %v735, %v1063
  %v1184 = vmul.f32 %v736, %v1065
  %v1185 = vmul.f32 %v737, %v1067
  %v1186 = vmul.f32 %v738, %v1069
  %v1187 = vmul.f32 %v739, %v1071
  %v1188 = vmul.f32 %v740, %v1073
  %v1189 = vmul.f32 %v741, %v1075
  %v1190 = vmul.f32 %v742, %v1077
  %v1191 = vmul.f32 %v743, %v1079
  %v1192 = vmul.f32 %v744, %v1081
  %v1193 = vmul.f32 %v745, %v1083
  %v1194 = vmul.f32 %v746, %v1085
  %v1195 = vmul.f32 %v747, %v1087
  %v1196 = vmul.f32 %v748, %v1089
  %v1197 = vmul.f32 %v749, %v1091
  %v1198 = vmul.f32 %v750, %v1093
  %v1199 = vmul.f32 %v751, %v1095
  %v1200 = vmul.f32 %v752, %v1097
  %v1201 = vmul.f32 %v753, %v1099
  %v1202 = vmul.f32 %v754, %v1101
  %v1203 = vmul.f32 %v755, %v1103
  %v1204 = vmul.f32 %v756, %v1105
  %v1205 = vmul.f32 %v757, %v1107
  %v1206 = vmul.f32 %v758, %v1109
  %v1207 = vmul.f32 %v759, %v1111
  %v1208 = vmul.f32 %v760, %v1113
  %v1209 = vmul.f32 %v761, %v1115
  %v1210 = vmul.f32 %v762, %v1117
  %v1211 = vmul.f32 %v763, %v1119
  %v1212 = vmul.f32 %v764, %v1121
  %v1213 = vmul.f32 %v765, %v1123
  %v1214 = vmul.f32 %v766, %v1125
  %v1215 = vmul.f32 %v767, %v1127
  %v1216 = vmul.f32 %v768, %v1129
  %v1217 = vmul.f32 %v769, %v1131
  %v1218 = vmul.f32 %v770, %v1133
  %v1219 = vmul.f32 %v771, %v1135
  %v1220 = vmul.f32 %v772, %v1137
  %v1221 = vmul.f32 %v773, %v1139
  %v1222 = vmul.f32 %v774, %v1141
  %v1223 = vmul.f32 %v775, %v1143
  %v1224 = vmul.f32 %v776, %v1145
  %v1225 = vmul.f32 %v777, %v1147
  %v1226 = vmul.f32 %v778, %v1149
  %v1227 = vmul.f32 %v779, %v1151
  %v1228 = vmul.f32 %v780, %v1153
  %v1229 = vmul.f32 %v781, %v1155
  %v1230 = vmul.f32 %v782, %v1157
  %v1231 = vmul.f32 %v783, %v1159
  %v1232 = vmul.f32 %v784, %v1161
  %v1233 = vmul.f32 %v785, %v1163
  %v1234 = vmul.f32 %v786, %v1165
  %v1235 = vmul.f32 %v787, %v1167
  %v1236 = vmul.f32 %v788, %v1169
  %v1237 = vmul.f32 %v789, %v1171
  %v1238 = vmul.f32 %v790, %v1173
  %v1239 = vmul.f32 %v791, %v1175
  %v1240 = vpack.c.bf16 %v1177, %v1176
  %v1241 = vpack.c.bf16 %v1179, %v1178
  %v1242 = vpack.c.bf16 %v1181, %v1180
  %v1243 = vpack.c.bf16 %v1183, %v1182
  %v1244 = vpack.c.bf16 %v1185, %v1184
  %v1245 = vpack.c.bf16 %v1187, %v1186
  %v1246 = vpack.c.bf16 %v1189, %v1188
  %v1247 = vpack.c.bf16 %v1191, %v1190
  %v1248 = vpack.c.bf16 %v1193, %v1192
  %v1249 = vpack.c.bf16 %v1195, %v1194
  %v1250 = vpack.c.bf16 %v1197, %v1196
  %v1251 = vpack.c.bf16 %v1199, %v1198
  %v1252 = vpack.c.bf16 %v1201, %v1200
  %v1253 = vpack.c.bf16 %v1203, %v1202
  %v1254 = vpack.c.bf16 %v1205, %v1204
  %v1255 = vpack.c.bf16 %v1207, %v1206
  %v1256 = vpack.c.bf16 %v1209, %v1208
  %v1257 = vpack.c.bf16 %v1211, %v1210
  %v1258 = vpack.c.bf16 %v1213, %v1212
  %v1259 = vpack.c.bf16 %v1215, %v1214
  %v1260 = vpack.c.bf16 %v1217, %v1216
  %v1261 = vpack.c.bf16 %v1219, %v1218
  %v1262 = vpack.c.bf16 %v1221, %v1220
  %v1263 = vpack.c.bf16 %v1223, %v1222
  %v1264 = vpack.c.bf16 %v1225, %v1224
  %v1265 = vpack.c.bf16 %v1227, %v1226
  %v1266 = vpack.c.bf16 %v1229, %v1228
  %v1267 = vpack.c.bf16 %v1231, %v1230
  %v1268 = vpack.c.bf16 %v1233, %v1232
  %v1269 = vpack.c.bf16 %v1235, %v1234
  %v1270 = vpack.c.bf16 %v1237, %v1236
  %v1271 = vpack.c.bf16 %v1239, %v1238
  %v1304 = vunpack.c.l.b16 %v1240
  %v1305 = vunpack.c.h.b16 %v1240
  %v1306 = vunpack.c.l.b16 %v1241
  %v1307 = vunpack.c.h.b16 %v1241
  %v1308 = vunpack.c.l.b16 %v1242
  %v1309 = vunpack.c.h.b16 %v1242
  %v1310 = vunpack.c.l.b16 %v1243
  %v1311 = vunpack.c.h.b16 %v1243
  %v1312 = vunpack.c.l.b16 %v1244
  %v1313 = vunpack.c.h.b16 %v1244
  %v1314 = vunpack.c.l.b16 %v1245
  %v1315 = vunpack.c.h.b16 %v1245
  %v1316 = vunpack.c.l.b16 %v1246
  %v1317 = vunpack.c.h.b16 %v1246
  %v1318 = vunpack.c.l.b16 %v1247
  %v1319 = vunpack.c.h.b16 %v1247
  %v1320 = vunpack.c.l.b16 %v1248
  %v1321 = vunpack.c.h.b16 %v1248
  %v1322 = vunpack.c.l.b16 %v1249
  %v1323 = vunpack.c.h.b16 %v1249
  %v1324 = vunpack.c.l.b16 %v1250
  %v1325 = vunpack.c.h.b16 %v1250
  %v1326 = vunpack.c.l.b16 %v1251
  %v1327 = vunpack.c.h.b16 %v1251
  %v1328 = vunpack.c.l.b16 %v1252
  %v1329 = vunpack.c.h.b16 %v1252
  %v1330 = vunpack.c.l.b16 %v1253
  %v1331 = vunpack.c.h.b16 %v1253
  %v1332 = vunpack.c.l.b16 %v1254
  %v1333 = vunpack.c.h.b16 %v1254
  %v1334 = vunpack.c.l.b16 %v1255
  %v1335 = vunpack.c.h.b16 %v1255
  %v1336 = vunpack.c.l.b16 %v1256
  %v1337 = vunpack.c.h.b16 %v1256
  %v1338 = vunpack.c.l.b16 %v1257
  %v1339 = vunpack.c.h.b16 %v1257
  %v1340 = vunpack.c.l.b16 %v1258
  %v1341 = vunpack.c.h.b16 %v1258
  %v1342 = vunpack.c.l.b16 %v1259
  %v1343 = vunpack.c.h.b16 %v1259
  %v1344 = vunpack.c.l.b16 %v1260
  %v1345 = vunpack.c.h.b16 %v1260
  %v1346 = vunpack.c.l.b16 %v1261
  %v1347 = vunpack.c.h.b16 %v1261
  %v1348 = vunpack.c.l.b16 %v1262
  %v1349 = vunpack.c.h.b16 %v1262
  %v1350 = vunpack.c.l.b16 %v1263
  %v1351 = vunpack.c.h.b16 %v1263
  %v1352 = vunpack.c.l.b16 %v1264
  %v1353 = vunpack.c.h.b16 %v1264
  %v1354 = vunpack.c.l.b16 %v1265
  %v1355 = vunpack.c.h.b16 %v1265
  %v1356 = vunpack.c.l.b16 %v1266
  %v1357 = vunpack.c.h.b16 %v1266
  %v1358 = vunpack.c.l.b16 %v1267
  %v1359 = vunpack.c.h.b16 %v1267
  %v1360 = vunpack.c.l.b16 %v1268
  %v1361 = vunpack.c.h.b16 %v1268
  %v1362 = vunpack.c.l.b16 %v1269
  %v1363 = vunpack.c.h.b16 %v1269
  %v1364 = vunpack.c.l.b16 %v1270
  %v1365 = vunpack.c.h.b16 %v1270
  %v1366 = vunpack.c.l.b16 %v1271
  %v1367 = vunpack.c.h.b16 %v1271
  %v1368 = vpack.c.b16 %v1304, %v1304
  %v1369 = vpack.c.b16 %v1305, %v1305
  %v1370 = vpack.c.b16 %v1306, %v1306
  %v1371 = vpack.c.b16 %v1307, %v1307
  %v1372 = vpack.c.b16 %v1308, %v1308
  %v1373 = vpack.c.b16 %v1309, %v1309
  %v1374 = vpack.c.b16 %v1310, %v1310
  %v1375 = vpack.c.b16 %v1311, %v1311
  %v1376 = vpack.c.b16 %v1312, %v1312
  %v1377 = vpack.c.b16 %v1313, %v1313
  %v1378 = vpack.c.b16 %v1314, %v1314
  %v1379 = vpack.c.b16 %v1315, %v1315
  %v1380 = vpack.c.b16 %v1316, %v1316
  %v1381 = vpack.c.b16 %v1317, %v1317
  %v1382 = vpack.c.b16 %v1318, %v1318
  %v1383 = vpack.c.b16 %v1319, %v1319
  %v1384 = vpack.c.b16 %v1320, %v1320
  %v1385 = vpack.c.b16 %v1321, %v1321
  %v1386 = vpack.c.b16 %v1322, %v1322
  %v1387 = vpack.c.b16 %v1323, %v1323
  %v1388 = vpack.c.b16 %v1324, %v1324
  %v1389 = vpack.c.b16 %v1325, %v1325
  %v1390 = vpack.c.b16 %v1326, %v1326
  %v1391 = vpack.c.b16 %v1327, %v1327
  %v1392 = vpack.c.b16 %v1328, %v1328
  %v1393 = vpack.c.b16 %v1329, %v1329
  %v1394 = vpack.c.b16 %v1330, %v1330
  %v1395 = vpack.c.b16 %v1331, %v1331
  %v1396 = vpack.c.b16 %v1332, %v1332
  %v1397 = vpack.c.b16 %v1333, %v1333
  %v1398 = vpack.c.b16 %v1334, %v1334
  %v1399 = vpack.c.b16 %v1335, %v1335
  %v1400 = vpack.c.b16 %v1336, %v1336
  %v1401 = vpack.c.b16 %v1337, %v1337
  %v1402 = vpack.c.b16 %v1338, %v1338
  %v1403 = vpack.c.b16 %v1339, %v1339
  %v1404 = vpack.c.b16 %v1340, %v1340
  %v1405 = vpack.c.b16 %v1341, %v1341
  %v1406 = vpack.c.b16 %v1342, %v1342
  %v1407 = vpack.c.b16 %v1343, %v1343
  %v1408 = vpack.c.b16 %v1344, %v1344
  %v1409 = vpack.c.b16 %v1345, %v1345
  %v1410 = vpack.c.b16 %v1346, %v1346
  %v1411 = vpack.c.b16 %v1347, %v1347
  %v1412 = vpack.c.b16 %v1348, %v1348
  %v1413 = vpack.c.b16 %v1349, %v1349
  %v1414 = vpack.c.b16 %v1350, %v1350
  %v1415 = vpack.c.b16 %v1351, %v1351
  %v1416 = vpack.c.b16 %v1352, %v1352
  %v1417 = vpack.c.b16 %v1353, %v1353
  %v1418 = vpack.c.b16 %v1354, %v1354
  %v1419 = vpack.c.b16 %v1355, %v1355
  %v1420 = vpack.c.b16 %v1356, %v1356
  %v1421 = vpack.c.b16 %v1357, %v1357
  %v1422 = vpack.c.b16 %v1358, %v1358
  %v1423 = vpack.c.b16 %v1359, %v1359
  %v1424 = vpack.c.b16 %v1360, %v1360
  %v1425 = vpack.c.b16 %v1361, %v1361
  %v1426 = vpack.c.b16 %v1362, %v1362
  %v1427 = vpack.c.b16 %v1363, %v1363
  %v1428 = vpack.c.b16 %v1364, %v1364
  %v1429 = vpack.c.b16 %v1365, %v1365
  %v1430 = vpack.c.b16 %v1366, %v1366
  %v1431 = vpack.c.b16 %v1367, %v1367
  %vm1496 = vcmask 191488
  %1497 = vst.msk [vmem:[%s4] sm:$0xf] %vm1496, %v1368
  %1498 = vst.msk [vmem:[%s4 + $0x4] sm:$0xf] %vm1496, %v1369
  %1499 = vst.msk [vmem:[%s4 + $0x8] sm:$0xf] %vm1496, %v1370
  %1500 = vst.msk [vmem:[%s4 + $0xc] sm:$0xf] %vm1496, %v1371
  %1501 = vst.msk [vmem:[%s4 + $0x10] sm:$0xf] %vm1496, %v1372
  %1502 = vst.msk [vmem:[%s4 + $0x14] sm:$0xf] %vm1496, %v1373
  %1503 = vst.msk [vmem:[%s4 + $0x18] sm:$0xf] %vm1496, %v1374
  %1504 = vst.msk [vmem:[%s4 + $0x1c] sm:$0xf] %vm1496, %v1375
  %1505 = vst.msk [vmem:[%s4 + $0x20] sm:$0xf] %vm1496, %v1376
  %1506 = vst.msk [vmem:[%s4 + $0x24] sm:$0xf] %vm1496, %v1377
  %1507 = vst.msk [vmem:[%s4 + $0x28] sm:$0xf] %vm1496, %v1378
  %1508 = vst.msk [vmem:[%s4 + $0x2c] sm:$0xf] %vm1496, %v1379
  %1509 = vst.msk [vmem:[%s4 + $0x30] sm:$0xf] %vm1496, %v1380
  %1510 = vst.msk [vmem:[%s4 + $0x34] sm:$0xf] %vm1496, %v1381
  %1511 = vst.msk [vmem:[%s4 + $0x38] sm:$0xf] %vm1496, %v1382
  %1512 = vst.msk [vmem:[%s4 + $0x3c] sm:$0xf] %vm1496, %v1383
  %1513 = vst.msk [vmem:[%s4 + $0x40] sm:$0xf] %vm1496, %v1384
  %1514 = vst.msk [vmem:[%s4 + $0x44] sm:$0xf] %vm1496, %v1385
  %1515 = vst.msk [vmem:[%s4 + $0x48] sm:$0xf] %vm1496, %v1386
  %1516 = vst.msk [vmem:[%s4 + $0x4c] sm:$0xf] %vm1496, %v1387
  %1517 = vst.msk [vmem:[%s4 + $0x50] sm:$0xf] %vm1496, %v1388
  %1518 = vst.msk [vmem:[%s4 + $0x54] sm:$0xf] %vm1496, %v1389
  %1519 = vst.msk [vmem:[%s4 + $0x58] sm:$0xf] %vm1496, %v1390
  %1520 = vst.msk [vmem:[%s4 + $0x5c] sm:$0xf] %vm1496, %v1391
  %1521 = vst.msk [vmem:[%s4 + $0x60] sm:$0xf] %vm1496, %v1392
  %1522 = vst.msk [vmem:[%s4 + $0x64] sm:$0xf] %vm1496, %v1393
  %1523 = vst.msk [vmem:[%s4 + $0x68] sm:$0xf] %vm1496, %v1394
  %1524 = vst.msk [vmem:[%s4 + $0x6c] sm:$0xf] %vm1496, %v1395
  %1525 = vst.msk [vmem:[%s4 + $0x70] sm:$0xf] %vm1496, %v1396
  %1526 = vst.msk [vmem:[%s4 + $0x74] sm:$0xf] %vm1496, %v1397
  %1527 = vst.msk [vmem:[%s4 + $0x78] sm:$0xf] %vm1496, %v1398
  %1528 = vst.msk [vmem:[%s4 + $0x7c] sm:$0xf] %vm1496, %v1399
  %1529 = vst.msk [vmem:[%s4 + $0x80] sm:$0xf] %vm1496, %v1400
  %1530 = vst.msk [vmem:[%s4 + $0x84] sm:$0xf] %vm1496, %v1401
  %1531 = vst.msk [vmem:[%s4 + $0x88] sm:$0xf] %vm1496, %v1402
  %1532 = vst.msk [vmem:[%s4 + $0x8c] sm:$0xf] %vm1496, %v1403
  %1533 = vst.msk [vmem:[%s4 + $0x90] sm:$0xf] %vm1496, %v1404
  %1534 = vst.msk [vmem:[%s4 + $0x94] sm:$0xf] %vm1496, %v1405
  %1535 = vst.msk [vmem:[%s4 + $0x98] sm:$0xf] %vm1496, %v1406
  %1536 = vst.msk [vmem:[%s4 + $0x9c] sm:$0xf] %vm1496, %v1407
  %1537 = vst.msk [vmem:[%s4 + $0xa0] sm:$0xf] %vm1496, %v1408
  %1538 = vst.msk [vmem:[%s4 + $0xa4] sm:$0xf] %vm1496, %v1409
  %1539 = vst.msk [vmem:[%s4 + $0xa8] sm:$0xf] %vm1496, %v1410
  %1540 = vst.msk [vmem:[%s4 + $0xac] sm:$0xf] %vm1496, %v1411
  %1541 = vst.msk [vmem:[%s4 + $0xb0] sm:$0xf] %vm1496, %v1412
  %1542 = vst.msk [vmem:[%s4 + $0xb4] sm:$0xf] %vm1496, %v1413
  %1543 = vst.msk [vmem:[%s4 + $0xb8] sm:$0xf] %vm1496, %v1414
  %1544 = vst.msk [vmem:[%s4 + $0xbc] sm:$0xf] %vm1496, %v1415
  %1545 = vst.msk [vmem:[%s4 + $0xc0] sm:$0xf] %vm1496, %v1416
  %1546 = vst.msk [vmem:[%s4 + $0xc4] sm:$0xf] %vm1496, %v1417
  %1547 = vst.msk [vmem:[%s4 + $0xc8] sm:$0xf] %vm1496, %v1418
  %1548 = vst.msk [vmem:[%s4 + $0xcc] sm:$0xf] %vm1496, %v1419
  %1549 = vst.msk [vmem:[%s4 + $0xd0] sm:$0xf] %vm1496, %v1420
  %1550 = vst.msk [vmem:[%s4 + $0xd4] sm:$0xf] %vm1496, %v1421
  %1551 = vst.msk [vmem:[%s4 + $0xd8] sm:$0xf] %vm1496, %v1422
  %1552 = vst.msk [vmem:[%s4 + $0xdc] sm:$0xf] %vm1496, %v1423
  %1553 = vst.msk [vmem:[%s4 + $0xe0] sm:$0xf] %vm1496, %v1424
  %1554 = vst.msk [vmem:[%s4 + $0xe4] sm:$0xf] %vm1496, %v1425
  %1555 = vst.msk [vmem:[%s4 + $0xe8] sm:$0xf] %vm1496, %v1426
  %1556 = vst.msk [vmem:[%s4 + $0xec] sm:$0xf] %vm1496, %v1427
  %1557 = vst.msk [vmem:[%s4 + $0xf0] sm:$0xf] %vm1496, %v1428
  %1558 = vst.msk [vmem:[%s4 + $0xf4] sm:$0xf] %vm1496, %v1429
  %1559 = vst.msk [vmem:[%s4 + $0xf8] sm:$0xf] %vm1496, %v1430
  %1560 = vst.msk [vmem:[%s4 + $0xfc] sm:$0xf] %vm1496, %v1431
  // Predicated region
  $region18: #{tpu_custom_call.1} parent=0 // pred_check
    _
  $region19: #{tpu_custom_call.1} parent=0 // pred_check_branch
    %1562 = sbr.rel (0) target = $region21
  $region20: #{tpu_custom_call.1} parent=0 // pred_region
    _
  $region21: #{tpu_custom_call.1} parent=0 // pred_fallthru
    _
  // Predicated region
  $region22: #{tpu_custom_call.1} parent=0 // pred_check
    _
  $region23: #{tpu_custom_call.1} parent=0 // pred_check_branch
    %1564 = sbr.rel (0) target = $region25
  $region24: #{tpu_custom_call.1} parent=0 // pred_region
    _
  $region25: #{tpu_custom_call.1} parent=0 // pred_fallthru
    _

</llo_original>
